<compile_context>
chip_gen: v6e
topology: v6e:2x2x1
jax: 0.10.0
libtpu: 0.0.40
codegen_flags: <defaults>
</compile_context>

<pallas_src>
import jax
import jax.numpy as jnp
from jax.experimental import pallas as pl
from jax.experimental.pallas import tpu as pltpu

_MIB = 1024 * 1024


def _round_up(x, m):
    return ((x + m - 1) // m) * m


def _vmem_capacity_bytes():
    try:
        return int(pltpu.get_tpu_info().vmem_capacity_bytes)
    except Exception:
        return 64 * _MIB            # conservative (v7x-sized) fallback


def _attention_kernel(enc_ref, h_ref, hs_ref, w1h_ref, w1v_ref, b1_ref,
                      w2t_ref, b2_ref, out_ref):
    # enc_ref : (TB, S, K)   encoder features [enc_prefix | enc_postfix] (bf16/f32)
    # h_ref   : (TB, K)      [prefix_hidden | postfix_hidden]  (f32, fc input)
    # hs_ref  : (TB, 1, K)   [prefix_hidden | 0] in enc dtype  (scoring hidden)
    #
    # Attention scores on the MXU; the streamed tile is consumed in its stored
    # dtype (no whole-tile f32 upcast), accumulation in f32.
    scores = jnp.einsum('bqk,bsk->bqs', hs_ref[...], enc_ref[...],
                        preferred_element_type=jnp.float32)            # (TB,1,S)
    scores = scores - jnp.max(scores, axis=-1, keepdims=True)
    e = jnp.exp(scores)
    dist = e / jnp.sum(e, axis=-1, keepdims=True)                       # exact softmax

    # Single fused weighted-context pass: ctx = [prefix_value | postfix_value].
    ctx3 = jnp.einsum('bqs,bsk->bqk', dist.astype(enc_ref.dtype), enc_ref[...],
                      preferred_element_type=jnp.float32)               # (TB,1,K)
    ctx = jnp.sum(ctx3, axis=1)                                          # (TB,K)

    # relu(tanh(.)) is elementwise, so the PyTorch 4-way concat folds into the
    # pre-split fc1 weights (two accumulating MXU matmuls).
    xh = jnp.maximum(jnp.tanh(h_ref[...].astype(jnp.float32)), 0.0)
    xv = jnp.maximum(jnp.tanh(ctx), 0.0)
    y = (jnp.dot(xh, w1h_ref[...], preferred_element_type=jnp.float32)
         + jnp.dot(xv, w1v_ref[...], preferred_element_type=jnp.float32)
         + b1_ref[...])
    y = jnp.maximum(y, 0.0)                         # dp1 identity (eval mode)
    y = jnp.dot(y, w2t_ref[...], preferred_element_type=jnp.float32) + b2_ref[...]

    # log_softmax over the lane-padded output features; padded lanes carry a
    # huge-negative bias so their exp() underflows to 0 and they don't perturb it.
    y = y - jnp.max(y, axis=-1, keepdims=True)
    lse = jnp.log(jnp.sum(jnp.exp(y), axis=-1, keepdims=True))
    out_ref[...] = (y - lse).astype(out_ref.dtype)


def prepare_params(w1, b1, w2, b2, dtype=jnp.float32):
    """One-time parameter preparation (hoist out of the per-step forward).

    w1: (2*hidden, 8*hidden) fc1 weight (PyTorch (out, in) layout)
    w2: (output_size, 2*hidden) fc2 weight
    """
    H2 = w1.shape[0]                                       # = 2*hidden
    out_size = w2.shape[0]
    out_pad = _round_up(max(out_size, 128), 128)           # lane-dense output slab

    w1t = jnp.asarray(w1, dtype).T                         # (4*H2, H2)
    # final_cat order in the PyTorch code: [pre_h, pre_val, post_h, post_val]
    w1_h = jnp.concatenate([w1t[0 * H2:1 * H2], w1t[2 * H2:3 * H2]], axis=0)  # (2*H2, H2)
    w1_v = jnp.concatenate([w1t[1 * H2:2 * H2], w1t[3 * H2:4 * H2]], axis=0)  # (2*H2, H2)

    w2t = jnp.asarray(w2, dtype).T                         # (H2, out)
    w2t = jnp.pad(w2t, ((0, 0), (0, out_pad - out_size)))  # zero weight in padded lanes
    b2r = jnp.asarray(b2, jnp.float32).reshape(1, -1)
    b2r = jnp.pad(b2r, ((0, 0), (0, out_pad - out_size)),
                  constant_values=-1e30)                   # padded logits -> exp()==0
    return dict(
        w1_h=w1_h,
        w1_v=w1_v,
        b1=jnp.asarray(b1, jnp.float32).reshape(1, -1),
        w2t=w2t,
        b2=b2r,
        out_size=int(out_size),
    )


def prepare_encoder(encoder_prefix_hiddens, encoder_postfix_hiddens,
                    dtype=jnp.bfloat16):
    """Once per encoded sequence: fuse the two encoder streams along features.

    bf16 by default (halves HBM traffic); the kernel accumulates in f32 on the MXU.
    Pass dtype=jnp.float32 for bit-tighter parity with the PyTorch reference.
    """
    return jnp.concatenate(
        [jnp.asarray(encoder_prefix_hiddens, dtype),
         jnp.asarray(encoder_postfix_hiddens, dtype)], axis=-1)        # (B, S, 2*H2)


def attention_forward(enc_cat, prefix_hidden, postfix_hidden, params, block_b=None):
    """Forward pass.  enc_cat from prepare_encoder, params from prepare_params."""
    B, S, K = enc_cat.shape
    H2 = K // 2
    out_pad = params["w2t"].shape[1]
    out_size = params["out_size"]
    itemsize = jnp.dtype(enc_cat.dtype).itemsize

    pre_h = jnp.asarray(prefix_hidden, jnp.float32)
    post_h = jnp.asarray(postfix_hidden, jnp.float32)
    h_cat = jnp.concatenate([pre_h, post_h], axis=-1)                   # (B, K) f32
    # Scoring hidden hoisted out of the kernel (original-module bug reproduced:
    # both attention distributions use the prefix hidden): [prefix | 0].
    h_score = jnp.concatenate([pre_h, jnp.zeros_like(post_h)], axis=-1)
    h_score = h_score.astype(enc_cat.dtype)[:, None, :]                 # (B, 1, K)

    vmem_cap = _vmem_capacity_bytes()
    # Generation-aware enc-tile budget: ~12 MiB on 128-MiB-VMEM chips (v5e/v6e),
    # ~8 MiB on v7x (64 MiB VMEM per TensorCore).
    tile_budget = min(12 * _MIB, vmem_cap // 8)

    per_row = max(1, S * K * itemsize)
    B_round = _round_up(B, 8)
    if block_b is None:
        block_b = max(8, min(512, (tile_budget // per_row) // 8 * 8))
        # Keep >= 2 grid steps when possible so both v7x TensorCores get work.
        if B_round >= 16:
            block_b = min(block_b, max(8, (B_round // 2) // 8 * 8))
        block_b = min(block_b, B_round)
    B_pad = _round_up(B, block_b)
    if B_pad != B:
        enc_cat = jnp.pad(enc_cat, ((0, B_pad - B), (0, 0), (0, 0)))
        h_cat = jnp.pad(h_cat, ((0, B_pad - B), (0, 0)))
        h_score = jnp.pad(h_score, ((0, B_pad - B), (0, 0), (0, 0)))

    # VMEM budget: double-buffered enc tile + small tiles + weights + slack.
    weight_keys = ("w1_h", "w1_v", "b1", "w2t", "b2")
    weight_bytes = sum(int(params[k].size) * params[k].dtype.itemsize
                       for k in weight_keys)
    needed = (2 * block_b * per_row
              + 4 * block_b * (2 * K + out_pad) * 4
              + 2 * weight_bytes)
    vmem_limit = int(min(3 * vmem_cap // 4, max(32 * _MIB, needed + 16 * _MIB)))
    # TODO(synk): if a single 8-row enc tile exceeds the VMEM budget (very long S),
    # the sequence dimension would also need tiling; not implemented.

    flops = (4 * B_pad * S * K                 # scores + weighted context (MXU)
             + 4 * B_pad * K * H2              # fc1 (two pre-split matmuls)
             + 2 * B_pad * H2 * out_pad)       # fc2
    transcendentals = B_pad * (S + 2 * K + out_pad + 1)
    bytes_accessed = (B_pad * S * K * itemsize          # dominant enc stream
                      + 2 * B_pad * K * 4
                      + weight_bytes
                      + B_pad * out_pad * 4)

    grid = (B_pad // block_b,)
    kernel = pl.pallas_call(
        _attention_kernel,
        out_shape=jax.ShapeDtypeStruct((B_pad, out_pad), jnp.float32),
        grid=grid,
        in_specs=[
            pl.BlockSpec((block_b, S, K), lambda i: (i, 0, 0)),      # streamed enc tile
            pl.BlockSpec((block_b, K), lambda i: (i, 0)),            # [pre_h | post_h]
            pl.BlockSpec((block_b, 1, K), lambda i: (i, 0, 0)),      # scoring hidden
            pl.BlockSpec(params["w1_h"].shape, lambda i: (0, 0)),    # grid-invariant weights
            pl.BlockSpec(params["w1_v"].shape, lambda i: (0, 0)),
            pl.BlockSpec(params["b1"].shape, lambda i: (0, 0)),
            pl.BlockSpec(params["w2t"].shape, lambda i: (0, 0)),
            pl.BlockSpec(params["b2"].shape, lambda i: (0, 0)),
        ],
        out_specs=pl.BlockSpec((block_b, out_pad), lambda i: (i, 0)),
        compiler_params=pltpu.CompilerParams(
            dimension_semantics=("parallel",),      # batch tiles shard across v7x's 2 TCs
            vmem_limit_bytes=vmem_limit),
        cost_estimate=pl.CostEstimate(flops=flops,
                                      transcendentals=transcendentals,
                                      bytes_accessed=bytes_accessed),
    )
    out = kernel(enc_cat, h_cat, h_score, params["w1_h"], params["w1_v"],
                 params["b1"], params["w2t"], params["b2"])
    return out[:B, :out_size]


def attention_module_forward(enc_pre, pre_h, enc_post, post_h, w1, b1, w2, b2,
                             enc_dtype=jnp.bfloat16):
    """Convenience wrapper matching the PyTorch module signature (fast bf16 stream)."""
    params = prepare_params(w1, b1, w2, b2)
    enc_cat = prepare_encoder(enc_pre, enc_post, dtype=enc_dtype)
    return attention_forward(enc_cat, pre_h, post_h, params)


def _reference(enc_pre, pre_h, enc_post, post_h, w1, b1, w2, b2):
    """Pure-JAX reference mirroring the PyTorch forward (eval mode)."""
    scores = jnp.einsum('bsh,bh->bs', enc_pre, pre_h)
    dist = jax.nn.softmax(scores, axis=1)
    pre_val = jnp.einsum('bs,bsh->bh', dist, enc_pre)
    post_val = jnp.einsum('bs,bsh->bh', dist, enc_post)   # same dist (original bug)
    final_cat = jnp.concatenate([pre_h, pre_val, post_h, post_val], axis=1)
    x = jax.nn.relu(jnp.tanh(final_cat))
    y = jax.nn.relu(x @ w1.T + b1)
    y = y @ w2.T + b2
    return jax.nn.log_softmax(y, axis=1)


if __name__ == "__main__":
    # Small shapes consistent with the module.
    hidden_size = 16
    output_size = 16
    B, S = 2, 8
    H2 = hidden_size * 2            # encoder / decoder hidden dim used in forward
    CAT = hidden_size * 2 * 2 * 2   # fc1 input = 4 * H2 = 128

    key = jax.random.PRNGKey(0)
    ks = jax.random.split(key, 8)

    enc_pre = jax.random.normal(ks[0], (B, S, H2), jnp.float32)
    pre_h = jax.random.normal(ks[1], (B, H2), jnp.float32)
    enc_post = jax.random.normal(ks[2], (B, S, H2), jnp.float32)
    post_h = jax.random.normal(ks[3], (B, H2), jnp.float32)

    # Deterministic PyTorch-Linear-style init.
    lim1 = 1.0 / jnp.sqrt(CAT)
    w1 = jax.random.uniform(ks[4], (H2, CAT), jnp.float32, -lim1, lim1)   # fc1.weight (out, in)
    b1 = jax.random.uniform(ks[5], (H2,), jnp.float32, -lim1, lim1)
    lim2 = 1.0 / jnp.sqrt(H2)
    w2 = jax.random.uniform(ks[6], (output_size, H2), jnp.float32, -lim2, lim2)  # fc2.weight
    b2 = jax.random.uniform(ks[7], (output_size,), jnp.float32, -lim2, lim2)

    ref = _reference(enc_pre, pre_h, enc_post, post_h, w1, b1, w2, b2)
    params = prepare_params(w1, b1, w2, b2)

    # Strict parity check on the f32 encoder path (exact softmax, f32 MXU accum).
    enc_f32 = prepare_encoder(enc_pre, enc_post, dtype=jnp.float32)
    out_f32 = jax.block_until_ready(attention_forward(enc_f32, pre_h, post_h, params))
    assert out_f32.shape == (B, output_size)
    assert jnp.allclose(out_f32, ref, atol=1e-2, rtol=1e-2), "f32 mismatch vs reference"

    # Default fast path: bf16-streamed encoder (half HBM bytes), f32 accumulation.
    out_bf16 = jax.block_until_ready(
        attention_module_forward(enc_pre, pre_h, enc_post, post_h, w1, b1, w2, b2))
    assert out_bf16.shape == (B, output_size)
    assert bool(jnp.all(jnp.isfinite(out_bf16)))
    assert jnp.allclose(out_bf16, ref, atol=1.5e-1, rtol=1.5e-1), "bf16 sanity vs reference"

    print("KERNEL_OK")
</pallas_src>

<mosaic_0001>
module attributes {stable_mosaic.version = 11 : i64} {
  func.func @_attention_kernel(%arg0: i32, %arg1: memref<8x8x64xf32, #tpu.memory_space<vmem>>, %arg2: memref<8x64xf32, #tpu.memory_space<vmem>>, %arg3: memref<8x1x64xf32, #tpu.memory_space<vmem>>, %arg4: memref<64x32xf32, #tpu.memory_space<vmem>>, %arg5: memref<64x32xf32, #tpu.memory_space<vmem>>, %arg6: memref<1x32xf32, #tpu.memory_space<vmem>>, %arg7: memref<32x128xf32, #tpu.memory_space<vmem>>, %arg8: memref<1x128xf32, #tpu.memory_space<vmem>>, %arg9: memref<8x128xf32, #tpu.memory_space<vmem>>) attributes {dimension_semantics = [#tpu.dimension_semantics<parallel>], iteration_bounds = array<i64: 1>, scalar_prefetch = 0 : i64, scratch_operands = 0 : i64, tpu.core_type = #tpu.core_type<tc>, window_params = [{transform_indices = @transform_0, window_bounds = array<i64: 8, 8, 64>}, {transform_indices = @transform_1, window_bounds = array<i64: 8, 64>}, {transform_indices = @transform_2, window_bounds = array<i64: 8, 1, 64>}, {pipeline_mode = #tpu.pipeline_mode<synchronous>, transform_indices = @transform_3, window_bounds = array<i64: 64, 32>}, {pipeline_mode = #tpu.pipeline_mode<synchronous>, transform_indices = @transform_4, window_bounds = array<i64: 64, 32>}, {pipeline_mode = #tpu.pipeline_mode<synchronous>, transform_indices = @transform_5, window_bounds = array<i64: 1, 32>}, {pipeline_mode = #tpu.pipeline_mode<synchronous>, transform_indices = @transform_6, window_bounds = array<i64: 32, 128>}, {pipeline_mode = #tpu.pipeline_mode<synchronous>, transform_indices = @transform_7, window_bounds = array<i64: 1, 128>}, {transform_indices = @transform_8, window_bounds = array<i64: 8, 128>}]} {
    %c0 = arith.constant 0 : index
    %c0_0 = arith.constant 0 : index
    %c0_1 = arith.constant 0 : index
    %0 = vector.load %arg3[%c0, %c0_0, %c0_1] : memref<8x1x64xf32, #tpu.memory_space<vmem>>, vector<8x1x64xf32>
    %c0_2 = arith.constant 0 : index
    %c0_3 = arith.constant 0 : index
    %c0_4 = arith.constant 0 : index
    %1 = vector.load %arg1[%c0_2, %c0_3, %c0_4] : memref<8x8x64xf32, #tpu.memory_space<vmem>>, vector<8x8x64xf32>
    "tpu.trace_start"() <{level = 10 : i32, message = "bqk,bsk->bqs"}> : () -> ()
    %cst = arith.constant dense<0.000000e+00> : vector<8x1x8xf32>
    %2 = tpu.matmul %0, %1, %cst {dimension_numbers = #tpu.dot_dimension_numbers<[2], [2], [1], [1], [0, 0, 0, 1, 1, 1], [0], [0]>} : vector<8x1x64xf32>, vector<8x8x64xf32>, vector<8x1x8xf32> -> vector<8x1x8xf32>
    "tpu.trace_stop"() : () -> ()
    %cst_5 = arith.constant dense<0xFF800000> : vector<8x1xf32>
    %3 = vector.multi_reduction <maximumf>, %2, %cst_5 [2] : vector<8x1x8xf32> to vector<8x1xf32>
    %4 = vector.shape_cast %3 : vector<8x1xf32> to vector<8x1x1xf32>
    %5 = vector.broadcast %4 : vector<8x1x1xf32> to vector<8x1x8xf32>
    %6 = arith.subf %2, %5 : vector<8x1x8xf32>
    %7 = math.exp %6 : vector<8x1x8xf32>
    %cst_6 = arith.constant dense<0.000000e+00> : vector<8x1xf32>
    %8 = vector.multi_reduction <add>, %7, %cst_6 [2] : vector<8x1x8xf32> to vector<8x1xf32>
    %9 = vector.shape_cast %8 : vector<8x1xf32> to vector<8x1x1xf32>
    %10 = vector.broadcast %9 : vector<8x1x1xf32> to vector<8x1x8xf32>
    %11 = arith.divf %7, %10 : vector<8x1x8xf32>
    %c0_7 = arith.constant 0 : index
    %c0_8 = arith.constant 0 : index
    %c0_9 = arith.constant 0 : index
    %12 = vector.load %arg1[%c0_7, %c0_8, %c0_9] : memref<8x8x64xf32, #tpu.memory_space<vmem>>, vector<8x8x64xf32>
    "tpu.trace_start"() <{level = 10 : i32, message = "bqs,bsk->bqk"}> : () -> ()
    %cst_10 = arith.constant dense<0.000000e+00> : vector<8x1x64xf32>
    %13 = tpu.matmul %11, %12, %cst_10 {dimension_numbers = #tpu.dot_dimension_numbers<[2], [1], [1], [2], [0, 0, 0, 1, 1, 2], [0], [0]>} : vector<8x1x8xf32>, vector<8x8x64xf32>, vector<8x1x64xf32> -> vector<8x1x64xf32>
    "tpu.trace_stop"() : () -> ()
    %cst_11 = arith.constant dense<0.000000e+00> : vector<8x64xf32>
    %14 = vector.multi_reduction <add>, %13, %cst_11 [1] : vector<8x1x64xf32> to vector<8x64xf32>
    %c0_12 = arith.constant 0 : index
    %c0_13 = arith.constant 0 : index
    %15 = vector.load %arg2[%c0_12, %c0_13] : memref<8x64xf32, #tpu.memory_space<vmem>>, vector<8x64xf32>
    %16 = math.tanh %15 : vector<8x64xf32>
    %cst_14 = arith.constant 0.000000e+00 : f32
    %17 = vector.broadcast %cst_14 : f32 to vector<8x64xf32>
    %18 = arith.maximumf %16, %17 : vector<8x64xf32>
    %19 = math.tanh %14 : vector<8x64xf32>
    %cst_15 = arith.constant 0.000000e+00 : f32
    %20 = vector.broadcast %cst_15 : f32 to vector<8x64xf32>
    %21 = arith.maximumf %19, %20 : vector<8x64xf32>
    %c0_16 = arith.constant 0 : index
    %c0_17 = arith.constant 0 : index
    %22 = vector.load %arg4[%c0_16, %c0_17] : memref<64x32xf32, #tpu.memory_space<vmem>>, vector<64x32xf32>
    %cst_18 = arith.constant dense<0.000000e+00> : vector<8x32xf32>
    %23 = tpu.matmul %18, %22, %cst_18 {dimension_numbers = #tpu.dot_dimension_numbers<[1], [0], [0], [1], [0, 0, 1, 1], [], []>} : vector<8x64xf32>, vector<64x32xf32>, vector<8x32xf32> -> vector<8x32xf32>
    %c0_19 = arith.constant 0 : index
    %c0_20 = arith.constant 0 : index
    %24 = vector.load %arg5[%c0_19, %c0_20] : memref<64x32xf32, #tpu.memory_space<vmem>>, vector<64x32xf32>
    %cst_21 = arith.constant dense<0.000000e+00> : vector<8x32xf32>
    %25 = tpu.matmul %21, %24, %cst_21 {dimension_numbers = #tpu.dot_dimension_numbers<[1], [0], [0], [1], [0, 0, 1, 1], [], []>} : vector<8x64xf32>, vector<64x32xf32>, vector<8x32xf32> -> vector<8x32xf32>
    %26 = arith.addf %23, %25 : vector<8x32xf32>
    %c0_22 = arith.constant 0 : index
    %c0_23 = arith.constant 0 : index
    %27 = vector.load %arg6[%c0_22, %c0_23] : memref<1x32xf32, #tpu.memory_space<vmem>>, vector<1x32xf32>
    %28 = vector.broadcast %27 : vector<1x32xf32> to vector<8x32xf32>
    %29 = arith.addf %26, %28 : vector<8x32xf32>
    %cst_24 = arith.constant 0.000000e+00 : f32
    %30 = vector.broadcast %cst_24 : f32 to vector<8x32xf32>
    %31 = arith.maximumf %29, %30 : vector<8x32xf32>
    %c0_25 = arith.constant 0 : index
    %c0_26 = arith.constant 0 : index
    %32 = vector.load %arg7[%c0_25, %c0_26] : memref<32x128xf32, #tpu.memory_space<vmem>>, vector<32x128xf32>
    %cst_27 = arith.constant dense<0.000000e+00> : vector<8x128xf32>
    %33 = tpu.matmul %31, %32, %cst_27 {dimension_numbers = #tpu.dot_dimension_numbers<[1], [0], [0], [1], [0, 0, 1, 1], [], []>} : vector<8x32xf32>, vector<32x128xf32>, vector<8x128xf32> -> vector<8x128xf32>
    %c0_28 = arith.constant 0 : index
    %c0_29 = arith.constant 0 : index
    %34 = vector.load %arg8[%c0_28, %c0_29] : memref<1x128xf32, #tpu.memory_space<vmem>>, vector<1x128xf32>
    %35 = vector.broadcast %34 : vector<1x128xf32> to vector<8x128xf32>
    %36 = arith.addf %33, %35 : vector<8x128xf32>
    %cst_30 = arith.constant dense<0xFF800000> : vector<8xf32>
    %37 = vector.multi_reduction <maximumf>, %36, %cst_30 [1] : vector<8x128xf32> to vector<8xf32>
    %38 = vector.shape_cast %37 : vector<8xf32> to vector<8x1xf32>
    %39 = vector.broadcast %38 : vector<8x1xf32> to vector<8x128xf32>
    %40 = arith.subf %36, %39 : vector<8x128xf32>
    %41 = math.exp %40 : vector<8x128xf32>
    %cst_31 = arith.constant dense<0.000000e+00> : vector<8xf32>
    %42 = vector.multi_reduction <add>, %41, %cst_31 [1] : vector<8x128xf32> to vector<8xf32>
    %43 = vector.shape_cast %42 : vector<8xf32> to vector<8x1xf32>
    %44 = math.log %43 : vector<8x1xf32>
    %45 = vector.broadcast %44 : vector<8x1xf32> to vector<8x128xf32>
    %46 = arith.subf %40, %45 : vector<8x128xf32>
    %c0_32 = arith.constant 0 : index
    %c0_33 = arith.constant 0 : index
    %47 = vector.load %arg9[%c0_32, %c0_33] : memref<8x128xf32, #tpu.memory_space<vmem>>, vector<8x128xf32>
    tpu.vector_store %arg9[%c0_32, %c0_33], %46 {strides = array<i32>} : memref<8x128xf32, #tpu.memory_space<vmem>>, vector<8x128xf32>,
    return
  }
  func.func @transform_0(%arg0: i32) -> (i32, i32, i32) {
    %c0_i32 = arith.constant 0 : i32
    %c0_i32_0 = arith.constant 0 : i32
    %c0_i32_1 = arith.constant 0 : i32
    return %arg0, %c0_i32, %c0_i32_0 : i32, i32, i32
  }
  func.func @transform_1(%arg0: i32) -> (i32, i32) {
    %c0_i32 = arith.constant 0 : i32
    %c0_i32_0 = arith.constant 0 : i32
    return %arg0, %c0_i32 : i32, i32
  }
  func.func @transform_2(%arg0: i32) -> (i32, i32, i32) {
    %c0_i32 = arith.constant 0 : i32
    %c0_i32_0 = arith.constant 0 : i32
    %c0_i32_1 = arith.constant 0 : i32
    return %arg0, %c0_i32, %c0_i32_0 : i32, i32, i32
  }
  func.func @transform_3(%arg0: i32) -> (i32, i32) {
    %c0_i32 = arith.constant 0 : i32
    %c0_i32_0 = arith.constant 0 : i32
    %c0_i32_1 = arith.constant 0 : i32
    return %c0_i32, %c0_i32_0 : i32, i32
  }
  func.func @transform_4(%arg0: i32) -> (i32, i32) {
    %c0_i32 = arith.constant 0 : i32
    %c0_i32_0 = arith.constant 0 : i32
    %c0_i32_1 = arith.constant 0 : i32
    return %c0_i32, %c0_i32_0 : i32, i32
  }
  func.func @transform_5(%arg0: i32) -> (i32, i32) {
    %c0_i32 = arith.constant 0 : i32
    %c0_i32_0 = arith.constant 0 : i32
    %c0_i32_1 = arith.constant 0 : i32
    return %c0_i32, %c0_i32_0 : i32, i32
  }
  func.func @transform_6(%arg0: i32) -> (i32, i32) {
    %c0_i32 = arith.constant 0 : i32
    %c0_i32_0 = arith.constant 0 : i32
    %c0_i32_1 = arith.constant 0 : i32
    return %c0_i32, %c0_i32_0 : i32, i32
  }
  func.func @transform_7(%arg0: i32) -> (i32, i32) {
    %c0_i32 = arith.constant 0 : i32
    %c0_i32_0 = arith.constant 0 : i32
    %c0_i32_1 = arith.constant 0 : i32
    return %c0_i32, %c0_i32_0 : i32, i32
  }
  func.func @transform_8(%arg0: i32) -> (i32, i32) {
    %c0_i32 = arith.constant 0 : i32
    %c0_i32_0 = arith.constant 0 : i32
    return %arg0, %c0_i32 : i32, i32
  }
}

</mosaic_0001>

<llo_original>
// kernel: tpu_custom_call.1
$region0: #{tpu_custom_call.1}
  #allocation0 [shape = 'u32[]', space=smem, size = 0x4, offset = 0x4, fixed_abs, tag = 'smem constant byte address 0x4 - core index']
  #allocation1 [shape = 'u32[144,128]{1,0:T(1,128)}', space=vmem, size = 0x12000, scoped, tag = 'internal scratch']
  %s0 = inlined_call_operand.vmem [shape: f32[8,8,64], index: 0, kind: input, shape index: {}]
  %s1 = inlined_call_operand.vmem [shape: f32[8,64], index: 1, kind: input, shape index: {}]
  %s2 = inlined_call_operand.vmem [shape: f32[8,1,64], index: 2, kind: input, shape index: {}]
  %s3 = inlined_call_operand.vmem [shape: f32[64,32], index: 3, kind: input, shape index: {}]
  %s4 = inlined_call_operand.vmem [shape: f32[64,32], index: 4, kind: input, shape index: {}]
  %s5 = inlined_call_operand.vmem [shape: f32[1,32], index: 5, kind: input, shape index: {}]
  %s6 = inlined_call_operand.vmem [shape: f32[32,128], index: 6, kind: input, shape index: {}]
  %s7 = inlined_call_operand.vmem [shape: f32[1,128], index: 7, kind: input, shape index: {}]
  %s8 = inlined_call_operand.hbm [shape: f32[8,128], index: 8, kind: output, shape index: {}]
  %s9 = sld [smem:[#allocation0]]
  $region42: #{tpu_custom_call.1} parent=0
    _
  %s11 = ssub.s32 1, %s9
  %s12 = scalar_select 0, %s11, %s9
  $region1: #{tpu_custom_call.1} parent=0
    #allocation2 [shape = 'u8[4096]{0}', space=vmem, size = 0x1000, scoped, tag = 'output window, operand 0, single buffered']
    #allocation3 [shape = 's32[1]{0}', space=sflag, size = 0x4, scoped, tag = 'scoped memory for tpu_custom_call.1']
    %13 = vsyncpa [#allocation3], 0
    // Predicated region
    $region2: #{tpu_custom_call.1} parent=1 // pred_check
      _
    $region3: #{tpu_custom_call.1} parent=1 // pred_check_branch
      %15 = sbr.rel (0) target = $region5
    $region4: #{tpu_custom_call.1} parent=1 // pred_region
      _
    $region5: #{tpu_custom_call.1} parent=1 // pred_fallthru
      _
    // Predicated region
    $region6: #{tpu_custom_call.1} parent=1 // pred_check
      _
    $region7: #{tpu_custom_call.1} parent=1 // pred_check_branch
      %17 = sbr.rel (0) target = $region9
    $region8: #{tpu_custom_call.1} parent=1 // pred_region
      _
    $region9: #{tpu_custom_call.1} parent=1 // pred_fallthru
      _
    // Predicated region
    $region10: #{tpu_custom_call.1} parent=1 // pred_check
      _
    $region11: #{tpu_custom_call.1} parent=1 // pred_check_branch
      %19 = sbr.rel (0) target = $region13
    $region12: #{tpu_custom_call.1} parent=1 // pred_region
      _
    $region13: #{tpu_custom_call.1} parent=1 // pred_fallthru
      _
    // Predicated region
    $region14: #{tpu_custom_call.1} parent=1 // pred_check
      _
    $region15: #{tpu_custom_call.1} parent=1 // pred_check_branch
      %21 = sbr.rel (0) target = $region17
    $region16: #{tpu_custom_call.1} parent=1 // pred_region
      _
    $region17: #{tpu_custom_call.1} parent=1 // pred_fallthru
      _
    // Predicated region
    $region18: #{tpu_custom_call.1} parent=1 // pred_check
      _
    $region19: #{tpu_custom_call.1} parent=1 // pred_check_branch
      %23 = sbr.rel (0) target = $region21
    $region20: #{tpu_custom_call.1} parent=1 // pred_region
      _
    $region21: #{tpu_custom_call.1} parent=1 // pred_fallthru
      _
    // Predicated region
    $region22: #{tpu_custom_call.1} parent=1 // pred_check
      _
    $region23: #{tpu_custom_call.1} parent=1 // pred_check_branch
      %25 = sbr.rel (0) target = $region25
    $region24: #{tpu_custom_call.1} parent=1 // pred_region
      _
    $region25: #{tpu_custom_call.1} parent=1 // pred_fallthru
      _
    // Predicated region
    $region26: #{tpu_custom_call.1} parent=1 // pred_check
      _
    $region27: #{tpu_custom_call.1} parent=1 // pred_check_branch
      %27 = sbr.rel (0) target = $region29
    $region28: #{tpu_custom_call.1} parent=1 // pred_region
      _
    $region29: #{tpu_custom_call.1} parent=1 // pred_fallthru
      _
    // Predicated region
    $region30: #{tpu_custom_call.1} parent=1 // pred_check
      _
    $region31: #{tpu_custom_call.1} parent=1 // pred_check_branch
      %29 = sbr.rel (0) target = $region33
    $region32: #{tpu_custom_call.1} parent=1 // pred_region
      _
    $region33: #{tpu_custom_call.1} parent=1 // pred_fallthru
      _
    %v30 = vld [vmem:[%s2] sm:$0x1]
    %v31 = vld [vmem:[%s2 + $0x1] sm:$0x1]
    %v32 = vld [vmem:[%s2 + $0x2] sm:$0x1]
    %v33 = vld [vmem:[%s2 + $0x3] sm:$0x1]
    %v34 = vld [vmem:[%s2 + $0x4] sm:$0x1]
    %v35 = vld [vmem:[%s2 + $0x5] sm:$0x1]
    %v36 = vld [vmem:[%s2 + $0x6] sm:$0x1]
    %v37 = vld [vmem:[%s2 + $0x7] sm:$0x1]
    %v38 = vld [vmem:[%s0] sm:$0xff]
    %v39 = vld [vmem:[%s0 + $0x8] sm:$0xff]
    %v40 = vld [vmem:[%s0 + $0x10] sm:$0xff]
    %v41 = vld [vmem:[%s0 + $0x18] sm:$0xff]
    %v42 = vld [vmem:[%s0 + $0x20] sm:$0xff]
    %v43 = vld [vmem:[%s0 + $0x28] sm:$0xff]
    %v44 = vld [vmem:[%s0 + $0x30] sm:$0xff]
    %v45 = vld [vmem:[%s0 + $0x38] sm:$0xff]
    %vm46 = vcmask 523264
    %v48 = vsel %vm46, %v30, 0
    %v51 = vsel %vm46, %v38, 0
    %53 = vmatprep.subr.mxu0 0.0
    %54 = vmatpush1.xpose.msra.mxu0 0.0
    %55 = vmatprep.subr.mxu0 0.0
    %56 = vmatpush1.xpose.msra.mxu0 0.0
    %57 = vmatprep.subr.mxu0 0.0
    %58 = vmatpush1.xpose.msra.mxu0 0.0
    %59 = vmatprep.subr.mxu0 0.0
    %60 = vmatpush1.xpose.msra.mxu0 0.0
    %61 = vmatprep.subr.mxu0 0.0
    %62 = vmatpush1.xpose.msra.mxu0 0.0
    %63 = vmatprep.subr.mxu0 0.0
    %64 = vmatpush1.xpose.msra.mxu0 0.0
    %65 = vmatprep.subr.mxu0 0.0
    %66 = vmatpush1.xpose.msra.mxu0 0.0
    %67 = vmatprep.subr.mxu0 0.0
    %68 = vmatpush1.xpose.msra.mxu0 0.0
    %69 = vmatprep.subr.mxu0 0.0
    %70 = vmatpush1.xpose.msra.mxu0 0.0
    %71 = vmatprep.subr.mxu0 0.0
    %72 = vmatpush1.xpose.msra.mxu0 0.0
    %73 = vmatprep.subr.mxu0 0.0
    %74 = vmatpush1.xpose.msra.mxu0 0.0
    %75 = vmatprep.subr.mxu0 0.0
    %76 = vmatpush1.xpose.msra.mxu0 0.0
    %77 = vmatprep.subr.mxu0 0.0
    %78 = vmatpush1.xpose.msra.mxu0 0.0
    %79 = vmatprep.subr.mxu0 0.0
    %80 = vmatpush1.xpose.msra.mxu0 0.0
    %81 = vmatprep.subr.mxu0 0.0
    %82 = vmatpush1.xpose.msra.mxu0 0.0
    %83 = vmatprep.subr.mxu0 0.0
    %84 = vmatpush1.xpose.msra.mxu0 %v51
    %85 = vmatprep.subr.mxu0 0.0
    %86 = vmatpush2.xpose.msra.mxu0 0.0
    %87 = vmatprep.subr.mxu0 0.0
    %88 = vmatpush2.xpose.msra.mxu0 0.0
    %89 = vmatprep.subr.mxu0 0.0
    %90 = vmatpush2.xpose.msra.mxu0 0.0
    %91 = vmatprep.subr.mxu0 0.0
    %92 = vmatpush2.xpose.msra.mxu0 0.0
    %93 = vmatprep.subr.mxu0 0.0
    %94 = vmatpush2.xpose.msra.mxu0 0.0
    %95 = vmatprep.subr.mxu0 0.0
    %96 = vmatpush2.xpose.msra.mxu0 0.0
    %97 = vmatprep.subr.mxu0 0.0
    %98 = vmatpush2.xpose.msra.mxu0 0.0
    %99 = vmatprep.subr.mxu0 0.0
    %100 = vmatpush2.xpose.msra.mxu0 0.0
    %101 = vmatprep.subr.mxu0 0.0
    %102 = vmatpush2.xpose.msra.mxu0 0.0
    %103 = vmatprep.subr.mxu0 0.0
    %104 = vmatpush2.xpose.msra.mxu0 0.0
    %105 = vmatprep.subr.mxu0 0.0
    %106 = vmatpush2.xpose.msra.mxu0 0.0
    %107 = vmatprep.subr.mxu0 0.0
    %108 = vmatpush2.xpose.msra.mxu0 0.0
    %109 = vmatprep.subr.mxu0 0.0
    %110 = vmatpush2.xpose.msra.mxu0 0.0
    %111 = vmatprep.subr.mxu0 0.0
    %112 = vmatpush2.xpose.msra.mxu0 0.0
    %113 = vmatprep.subr.mxu0 0.0
    %114 = vmatpush2.xpose.msra.mxu0 0.0
    %115 = vmatprep.subr.mxu0 0.0
    %116 = vmatpush2.xpose.msra.mxu0 0.0
    %117 = vmatprep.mubr.f32.mxu0 0.0
    %118 = vmatmul.mubr.f32.gmra.mxu0 %v48
    %v119 = vpop.f32.mrf.mxu0
    %v120 = vadd.f32 0.0, %v119
    %v121 = vpop.f32.mrf.mxu0
    %122 = vdwg.mxu0
    %v124 = vsel %vm46, %v31, 0
    %v127 = vsel %vm46, %v39, 0
    %129 = vmatprep.subr.mxu0 0.0
    %130 = vmatpush1.xpose.msra.mxu0 0.0
    %131 = vmatprep.subr.mxu0 0.0
    %132 = vmatpush1.xpose.msra.mxu0 0.0
    %133 = vmatprep.subr.mxu0 0.0
    %134 = vmatpush1.xpose.msra.mxu0 0.0
    %135 = vmatprep.subr.mxu0 0.0
    %136 = vmatpush1.xpose.msra.mxu0 0.0
    %137 = vmatprep.subr.mxu0 0.0
    %138 = vmatpush1.xpose.msra.mxu0 0.0
    %139 = vmatprep.subr.mxu0 0.0
    %140 = vmatpush1.xpose.msra.mxu0 0.0
    %141 = vmatprep.subr.mxu0 0.0
    %142 = vmatpush1.xpose.msra.mxu0 0.0
    %143 = vmatprep.subr.mxu0 0.0
    %144 = vmatpush1.xpose.msra.mxu0 0.0
    %145 = vmatprep.subr.mxu0 0.0
    %146 = vmatpush1.xpose.msra.mxu0 0.0
    %147 = vmatprep.subr.mxu0 0.0
    %148 = vmatpush1.xpose.msra.mxu0 0.0
    %149 = vmatprep.subr.mxu0 0.0
    %150 = vmatpush1.xpose.msra.mxu0 0.0
    %151 = vmatprep.subr.mxu0 0.0
    %152 = vmatpush1.xpose.msra.mxu0 0.0
    %153 = vmatprep.subr.mxu0 0.0
    %154 = vmatpush1.xpose.msra.mxu0 0.0
    %155 = vmatprep.subr.mxu0 0.0
    %156 = vmatpush1.xpose.msra.mxu0 0.0
    %157 = vmatprep.subr.mxu0 0.0
    %158 = vmatpush1.xpose.msra.mxu0 0.0
    %159 = vmatprep.subr.mxu0 0.0
    %160 = vmatpush1.xpose.msra.mxu0 %v127
    %161 = vmatprep.subr.mxu0 0.0
    %162 = vmatpush2.xpose.msra.mxu0 0.0
    %163 = vmatprep.subr.mxu0 0.0
    %164 = vmatpush2.xpose.msra.mxu0 0.0
    %165 = vmatprep.subr.mxu0 0.0
    %166 = vmatpush2.xpose.msra.mxu0 0.0
    %167 = vmatprep.subr.mxu0 0.0
    %168 = vmatpush2.xpose.msra.mxu0 0.0
    %169 = vmatprep.subr.mxu0 0.0
    %170 = vmatpush2.xpose.msra.mxu0 0.0
    %171 = vmatprep.subr.mxu0 0.0
    %172 = vmatpush2.xpose.msra.mxu0 0.0
    %173 = vmatprep.subr.mxu0 0.0
    %174 = vmatpush2.xpose.msra.mxu0 0.0
    %175 = vmatprep.subr.mxu0 0.0
    %176 = vmatpush2.xpose.msra.mxu0 0.0
    %177 = vmatprep.subr.mxu0 0.0
    %178 = vmatpush2.xpose.msra.mxu0 0.0
    %179 = vmatprep.subr.mxu0 0.0
    %180 = vmatpush2.xpose.msra.mxu0 0.0
    %181 = vmatprep.subr.mxu0 0.0
    %182 = vmatpush2.xpose.msra.mxu0 0.0
    %183 = vmatprep.subr.mxu0 0.0
    %184 = vmatpush2.xpose.msra.mxu0 0.0
    %185 = vmatprep.subr.mxu0 0.0
    %186 = vmatpush2.xpose.msra.mxu0 0.0
    %187 = vmatprep.subr.mxu0 0.0
    %188 = vmatpush2.xpose.msra.mxu0 0.0
    %189 = vmatprep.subr.mxu0 0.0
    %190 = vmatpush2.xpose.msra.mxu0 0.0
    %191 = vmatprep.subr.mxu0 0.0
    %192 = vmatpush2.xpose.msra.mxu0 0.0
    %193 = vmatprep.mubr.f32.mxu0 0.0
    %194 = vmatmul.mubr.f32.gmra.mxu0 %v124
    %v195 = vpop.f32.mrf.mxu0
    %v196 = vadd.f32 0.0, %v195
    %v197 = vpop.f32.mrf.mxu0
    %198 = vdwg.mxu0
    %v200 = vsel %vm46, %v32, 0
    %v203 = vsel %vm46, %v40, 0
    %205 = vmatprep.subr.mxu0 0.0
    %206 = vmatpush1.xpose.msra.mxu0 0.0
    %207 = vmatprep.subr.mxu0 0.0
    %208 = vmatpush1.xpose.msra.mxu0 0.0
    %209 = vmatprep.subr.mxu0 0.0
    %210 = vmatpush1.xpose.msra.mxu0 0.0
    %211 = vmatprep.subr.mxu0 0.0
    %212 = vmatpush1.xpose.msra.mxu0 0.0
    %213 = vmatprep.subr.mxu0 0.0
    %214 = vmatpush1.xpose.msra.mxu0 0.0
    %215 = vmatprep.subr.mxu0 0.0
    %216 = vmatpush1.xpose.msra.mxu0 0.0
    %217 = vmatprep.subr.mxu0 0.0
    %218 = vmatpush1.xpose.msra.mxu0 0.0
    %219 = vmatprep.subr.mxu0 0.0
    %220 = vmatpush1.xpose.msra.mxu0 0.0
    %221 = vmatprep.subr.mxu0 0.0
    %222 = vmatpush1.xpose.msra.mxu0 0.0
    %223 = vmatprep.subr.mxu0 0.0
    %224 = vmatpush1.xpose.msra.mxu0 0.0
    %225 = vmatprep.subr.mxu0 0.0
    %226 = vmatpush1.xpose.msra.mxu0 0.0
    %227 = vmatprep.subr.mxu0 0.0
    %228 = vmatpush1.xpose.msra.mxu0 0.0
    %229 = vmatprep.subr.mxu0 0.0
    %230 = vmatpush1.xpose.msra.mxu0 0.0
    %231 = vmatprep.subr.mxu0 0.0
    %232 = vmatpush1.xpose.msra.mxu0 0.0
    %233 = vmatprep.subr.mxu0 0.0
    %234 = vmatpush1.xpose.msra.mxu0 0.0
    %235 = vmatprep.subr.mxu0 0.0
    %236 = vmatpush1.xpose.msra.mxu0 %v203
    %237 = vmatprep.subr.mxu0 0.0
    %238 = vmatpush2.xpose.msra.mxu0 0.0
    %239 = vmatprep.subr.mxu0 0.0
    %240 = vmatpush2.xpose.msra.mxu0 0.0
    %241 = vmatprep.subr.mxu0 0.0
    %242 = vmatpush2.xpose.msra.mxu0 0.0
    %243 = vmatprep.subr.mxu0 0.0
    %244 = vmatpush2.xpose.msra.mxu0 0.0
    %245 = vmatprep.subr.mxu0 0.0
    %246 = vmatpush2.xpose.msra.mxu0 0.0
    %247 = vmatprep.subr.mxu0 0.0
    %248 = vmatpush2.xpose.msra.mxu0 0.0
    %249 = vmatprep.subr.mxu0 0.0
    %250 = vmatpush2.xpose.msra.mxu0 0.0
    %251 = vmatprep.subr.mxu0 0.0
    %252 = vmatpush2.xpose.msra.mxu0 0.0
    %253 = vmatprep.subr.mxu0 0.0
    %254 = vmatpush2.xpose.msra.mxu0 0.0
    %255 = vmatprep.subr.mxu0 0.0
    %256 = vmatpush2.xpose.msra.mxu0 0.0
    %257 = vmatprep.subr.mxu0 0.0
    %258 = vmatpush2.xpose.msra.mxu0 0.0
    %259 = vmatprep.subr.mxu0 0.0
    %260 = vmatpush2.xpose.msra.mxu0 0.0
    %261 = vmatprep.subr.mxu0 0.0
    %262 = vmatpush2.xpose.msra.mxu0 0.0
    %263 = vmatprep.subr.mxu0 0.0
    %264 = vmatpush2.xpose.msra.mxu0 0.0
    %265 = vmatprep.subr.mxu0 0.0
    %266 = vmatpush2.xpose.msra.mxu0 0.0
    %267 = vmatprep.subr.mxu0 0.0
    %268 = vmatpush2.xpose.msra.mxu0 0.0
    %269 = vmatprep.mubr.f32.mxu0 0.0
    %270 = vmatmul.mubr.f32.gmra.mxu0 %v200
    %v271 = vpop.f32.mrf.mxu0
    %v272 = vadd.f32 0.0, %v271
    %v273 = vpop.f32.mrf.mxu0
    %274 = vdwg.mxu0
    %v276 = vsel %vm46, %v33, 0
    %v279 = vsel %vm46, %v41, 0
    %281 = vmatprep.subr.mxu0 0.0
    %282 = vmatpush1.xpose.msra.mxu0 0.0
    %283 = vmatprep.subr.mxu0 0.0
    %284 = vmatpush1.xpose.msra.mxu0 0.0
    %285 = vmatprep.subr.mxu0 0.0
    %286 = vmatpush1.xpose.msra.mxu0 0.0
    %287 = vmatprep.subr.mxu0 0.0
    %288 = vmatpush1.xpose.msra.mxu0 0.0
    %289 = vmatprep.subr.mxu0 0.0
    %290 = vmatpush1.xpose.msra.mxu0 0.0
    %291 = vmatprep.subr.mxu0 0.0
    %292 = vmatpush1.xpose.msra.mxu0 0.0
    %293 = vmatprep.subr.mxu0 0.0
    %294 = vmatpush1.xpose.msra.mxu0 0.0
    %295 = vmatprep.subr.mxu0 0.0
    %296 = vmatpush1.xpose.msra.mxu0 0.0
    %297 = vmatprep.subr.mxu0 0.0
    %298 = vmatpush1.xpose.msra.mxu0 0.0
    %299 = vmatprep.subr.mxu0 0.0
    %300 = vmatpush1.xpose.msra.mxu0 0.0
    %301 = vmatprep.subr.mxu0 0.0
    %302 = vmatpush1.xpose.msra.mxu0 0.0
    %303 = vmatprep.subr.mxu0 0.0
    %304 = vmatpush1.xpose.msra.mxu0 0.0
    %305 = vmatprep.subr.mxu0 0.0
    %306 = vmatpush1.xpose.msra.mxu0 0.0
    %307 = vmatprep.subr.mxu0 0.0
    %308 = vmatpush1.xpose.msra.mxu0 0.0
    %309 = vmatprep.subr.mxu0 0.0
    %310 = vmatpush1.xpose.msra.mxu0 0.0
    %311 = vmatprep.subr.mxu0 0.0
    %312 = vmatpush1.xpose.msra.mxu0 %v279
    %313 = vmatprep.subr.mxu0 0.0
    %314 = vmatpush2.xpose.msra.mxu0 0.0
    %315 = vmatprep.subr.mxu0 0.0
    %316 = vmatpush2.xpose.msra.mxu0 0.0
    %317 = vmatprep.subr.mxu0 0.0
    %318 = vmatpush2.xpose.msra.mxu0 0.0
    %319 = vmatprep.subr.mxu0 0.0
    %320 = vmatpush2.xpose.msra.mxu0 0.0
    %321 = vmatprep.subr.mxu0 0.0
    %322 = vmatpush2.xpose.msra.mxu0 0.0
    %323 = vmatprep.subr.mxu0 0.0
    %324 = vmatpush2.xpose.msra.mxu0 0.0
    %325 = vmatprep.subr.mxu0 0.0
    %326 = vmatpush2.xpose.msra.mxu0 0.0
    %327 = vmatprep.subr.mxu0 0.0
    %328 = vmatpush2.xpose.msra.mxu0 0.0
    %329 = vmatprep.subr.mxu0 0.0
    %330 = vmatpush2.xpose.msra.mxu0 0.0
    %331 = vmatprep.subr.mxu0 0.0
    %332 = vmatpush2.xpose.msra.mxu0 0.0
    %333 = vmatprep.subr.mxu0 0.0
    %334 = vmatpush2.xpose.msra.mxu0 0.0
    %335 = vmatprep.subr.mxu0 0.0
    %336 = vmatpush2.xpose.msra.mxu0 0.0
    %337 = vmatprep.subr.mxu0 0.0
    %338 = vmatpush2.xpose.msra.mxu0 0.0
    %339 = vmatprep.subr.mxu0 0.0
    %340 = vmatpush2.xpose.msra.mxu0 0.0
    %341 = vmatprep.subr.mxu0 0.0
    %342 = vmatpush2.xpose.msra.mxu0 0.0
    %343 = vmatprep.subr.mxu0 0.0
    %344 = vmatpush2.xpose.msra.mxu0 0.0
    %345 = vmatprep.mubr.f32.mxu0 0.0
    %346 = vmatmul.mubr.f32.gmra.mxu0 %v276
    %v347 = vpop.f32.mrf.mxu0
    %v348 = vadd.f32 0.0, %v347
    %v349 = vpop.f32.mrf.mxu0
    %350 = vdwg.mxu0
    %v352 = vsel %vm46, %v34, 0
    %v355 = vsel %vm46, %v42, 0
    %357 = vmatprep.subr.mxu0 0.0
    %358 = vmatpush1.xpose.msra.mxu0 0.0
    %359 = vmatprep.subr.mxu0 0.0
    %360 = vmatpush1.xpose.msra.mxu0 0.0
    %361 = vmatprep.subr.mxu0 0.0
    %362 = vmatpush1.xpose.msra.mxu0 0.0
    %363 = vmatprep.subr.mxu0 0.0
    %364 = vmatpush1.xpose.msra.mxu0 0.0
    %365 = vmatprep.subr.mxu0 0.0
    %366 = vmatpush1.xpose.msra.mxu0 0.0
    %367 = vmatprep.subr.mxu0 0.0
    %368 = vmatpush1.xpose.msra.mxu0 0.0
    %369 = vmatprep.subr.mxu0 0.0
    %370 = vmatpush1.xpose.msra.mxu0 0.0
    %371 = vmatprep.subr.mxu0 0.0
    %372 = vmatpush1.xpose.msra.mxu0 0.0
    %373 = vmatprep.subr.mxu0 0.0
    %374 = vmatpush1.xpose.msra.mxu0 0.0
    %375 = vmatprep.subr.mxu0 0.0
    %376 = vmatpush1.xpose.msra.mxu0 0.0
    %377 = vmatprep.subr.mxu0 0.0
    %378 = vmatpush1.xpose.msra.mxu0 0.0
    %379 = vmatprep.subr.mxu0 0.0
    %380 = vmatpush1.xpose.msra.mxu0 0.0
    %381 = vmatprep.subr.mxu0 0.0
    %382 = vmatpush1.xpose.msra.mxu0 0.0
    %383 = vmatprep.subr.mxu0 0.0
    %384 = vmatpush1.xpose.msra.mxu0 0.0
    %385 = vmatprep.subr.mxu0 0.0
    %386 = vmatpush1.xpose.msra.mxu0 0.0
    %387 = vmatprep.subr.mxu0 0.0
    %388 = vmatpush1.xpose.msra.mxu0 %v355
    %389 = vmatprep.subr.mxu0 0.0
    %390 = vmatpush2.xpose.msra.mxu0 0.0
    %391 = vmatprep.subr.mxu0 0.0
    %392 = vmatpush2.xpose.msra.mxu0 0.0
    %393 = vmatprep.subr.mxu0 0.0
    %394 = vmatpush2.xpose.msra.mxu0 0.0
    %395 = vmatprep.subr.mxu0 0.0
    %396 = vmatpush2.xpose.msra.mxu0 0.0
    %397 = vmatprep.subr.mxu0 0.0
    %398 = vmatpush2.xpose.msra.mxu0 0.0
    %399 = vmatprep.subr.mxu0 0.0
    %400 = vmatpush2.xpose.msra.mxu0 0.0
    %401 = vmatprep.subr.mxu0 0.0
    %402 = vmatpush2.xpose.msra.mxu0 0.0
    %403 = vmatprep.subr.mxu0 0.0
    %404 = vmatpush2.xpose.msra.mxu0 0.0
    %405 = vmatprep.subr.mxu0 0.0
    %406 = vmatpush2.xpose.msra.mxu0 0.0
    %407 = vmatprep.subr.mxu0 0.0
    %408 = vmatpush2.xpose.msra.mxu0 0.0
    %409 = vmatprep.subr.mxu0 0.0
    %410 = vmatpush2.xpose.msra.mxu0 0.0
    %411 = vmatprep.subr.mxu0 0.0
    %412 = vmatpush2.xpose.msra.mxu0 0.0
    %413 = vmatprep.subr.mxu0 0.0
    %414 = vmatpush2.xpose.msra.mxu0 0.0
    %415 = vmatprep.subr.mxu0 0.0
    %416 = vmatpush2.xpose.msra.mxu0 0.0
    %417 = vmatprep.subr.mxu0 0.0
    %418 = vmatpush2.xpose.msra.mxu0 0.0
    %419 = vmatprep.subr.mxu0 0.0
    %420 = vmatpush2.xpose.msra.mxu0 0.0
    %421 = vmatprep.mubr.f32.mxu0 0.0
    %422 = vmatmul.mubr.f32.gmra.mxu0 %v352
    %v423 = vpop.f32.mrf.mxu0
    %v424 = vadd.f32 0.0, %v423
    %v425 = vpop.f32.mrf.mxu0
    %426 = vdwg.mxu0
    %v428 = vsel %vm46, %v35, 0
    %v431 = vsel %vm46, %v43, 0
    %433 = vmatprep.subr.mxu0 0.0
    %434 = vmatpush1.xpose.msra.mxu0 0.0
    %435 = vmatprep.subr.mxu0 0.0
    %436 = vmatpush1.xpose.msra.mxu0 0.0
    %437 = vmatprep.subr.mxu0 0.0
    %438 = vmatpush1.xpose.msra.mxu0 0.0
    %439 = vmatprep.subr.mxu0 0.0
    %440 = vmatpush1.xpose.msra.mxu0 0.0
    %441 = vmatprep.subr.mxu0 0.0
    %442 = vmatpush1.xpose.msra.mxu0 0.0
    %443 = vmatprep.subr.mxu0 0.0
    %444 = vmatpush1.xpose.msra.mxu0 0.0
    %445 = vmatprep.subr.mxu0 0.0
    %446 = vmatpush1.xpose.msra.mxu0 0.0
    %447 = vmatprep.subr.mxu0 0.0
    %448 = vmatpush1.xpose.msra.mxu0 0.0
    %449 = vmatprep.subr.mxu0 0.0
    %450 = vmatpush1.xpose.msra.mxu0 0.0
    %451 = vmatprep.subr.mxu0 0.0
    %452 = vmatpush1.xpose.msra.mxu0 0.0
    %453 = vmatprep.subr.mxu0 0.0
    %454 = vmatpush1.xpose.msra.mxu0 0.0
    %455 = vmatprep.subr.mxu0 0.0
    %456 = vmatpush1.xpose.msra.mxu0 0.0
    %457 = vmatprep.subr.mxu0 0.0
    %458 = vmatpush1.xpose.msra.mxu0 0.0
    %459 = vmatprep.subr.mxu0 0.0
    %460 = vmatpush1.xpose.msra.mxu0 0.0
    %461 = vmatprep.subr.mxu0 0.0
    %462 = vmatpush1.xpose.msra.mxu0 0.0
    %463 = vmatprep.subr.mxu0 0.0
    %464 = vmatpush1.xpose.msra.mxu0 %v431
    %465 = vmatprep.subr.mxu0 0.0
    %466 = vmatpush2.xpose.msra.mxu0 0.0
    %467 = vmatprep.subr.mxu0 0.0
    %468 = vmatpush2.xpose.msra.mxu0 0.0
    %469 = vmatprep.subr.mxu0 0.0
    %470 = vmatpush2.xpose.msra.mxu0 0.0
    %471 = vmatprep.subr.mxu0 0.0
    %472 = vmatpush2.xpose.msra.mxu0 0.0
    %473 = vmatprep.subr.mxu0 0.0
    %474 = vmatpush2.xpose.msra.mxu0 0.0
    %475 = vmatprep.subr.mxu0 0.0
    %476 = vmatpush2.xpose.msra.mxu0 0.0
    %477 = vmatprep.subr.mxu0 0.0
    %478 = vmatpush2.xpose.msra.mxu0 0.0
    %479 = vmatprep.subr.mxu0 0.0
    %480 = vmatpush2.xpose.msra.mxu0 0.0
    %481 = vmatprep.subr.mxu0 0.0
    %482 = vmatpush2.xpose.msra.mxu0 0.0
    %483 = vmatprep.subr.mxu0 0.0
    %484 = vmatpush2.xpose.msra.mxu0 0.0
    %485 = vmatprep.subr.mxu0 0.0
    %486 = vmatpush2.xpose.msra.mxu0 0.0
    %487 = vmatprep.subr.mxu0 0.0
    %488 = vmatpush2.xpose.msra.mxu0 0.0
    %489 = vmatprep.subr.mxu0 0.0
    %490 = vmatpush2.xpose.msra.mxu0 0.0
    %491 = vmatprep.subr.mxu0 0.0
    %492 = vmatpush2.xpose.msra.mxu0 0.0
    %493 = vmatprep.subr.mxu0 0.0
    %494 = vmatpush2.xpose.msra.mxu0 0.0
    %495 = vmatprep.subr.mxu0 0.0
    %496 = vmatpush2.xpose.msra.mxu0 0.0
    %497 = vmatprep.mubr.f32.mxu0 0.0
    %498 = vmatmul.mubr.f32.gmra.mxu0 %v428
    %v499 = vpop.f32.mrf.mxu0
    %v500 = vadd.f32 0.0, %v499
    %v501 = vpop.f32.mrf.mxu0
    %502 = vdwg.mxu0
    %v504 = vsel %vm46, %v36, 0
    %v507 = vsel %vm46, %v44, 0
    %509 = vmatprep.subr.mxu0 0.0
    %510 = vmatpush1.xpose.msra.mxu0 0.0
    %511 = vmatprep.subr.mxu0 0.0
    %512 = vmatpush1.xpose.msra.mxu0 0.0
    %513 = vmatprep.subr.mxu0 0.0
    %514 = vmatpush1.xpose.msra.mxu0 0.0
    %515 = vmatprep.subr.mxu0 0.0
    %516 = vmatpush1.xpose.msra.mxu0 0.0
    %517 = vmatprep.subr.mxu0 0.0
    %518 = vmatpush1.xpose.msra.mxu0 0.0
    %519 = vmatprep.subr.mxu0 0.0
    %520 = vmatpush1.xpose.msra.mxu0 0.0
    %521 = vmatprep.subr.mxu0 0.0
    %522 = vmatpush1.xpose.msra.mxu0 0.0
    %523 = vmatprep.subr.mxu0 0.0
    %524 = vmatpush1.xpose.msra.mxu0 0.0
    %525 = vmatprep.subr.mxu0 0.0
    %526 = vmatpush1.xpose.msra.mxu0 0.0
    %527 = vmatprep.subr.mxu0 0.0
    %528 = vmatpush1.xpose.msra.mxu0 0.0
    %529 = vmatprep.subr.mxu0 0.0
    %530 = vmatpush1.xpose.msra.mxu0 0.0
    %531 = vmatprep.subr.mxu0 0.0
    %532 = vmatpush1.xpose.msra.mxu0 0.0
    %533 = vmatprep.subr.mxu0 0.0
    %534 = vmatpush1.xpose.msra.mxu0 0.0
    %535 = vmatprep.subr.mxu0 0.0
    %536 = vmatpush1.xpose.msra.mxu0 0.0
    %537 = vmatprep.subr.mxu0 0.0
    %538 = vmatpush1.xpose.msra.mxu0 0.0
    %539 = vmatprep.subr.mxu0 0.0
    %540 = vmatpush1.xpose.msra.mxu0 %v507
    %541 = vmatprep.subr.mxu0 0.0
    %542 = vmatpush2.xpose.msra.mxu0 0.0
    %543 = vmatprep.subr.mxu0 0.0
    %544 = vmatpush2.xpose.msra.mxu0 0.0
    %545 = vmatprep.subr.mxu0 0.0
    %546 = vmatpush2.xpose.msra.mxu0 0.0
    %547 = vmatprep.subr.mxu0 0.0
    %548 = vmatpush2.xpose.msra.mxu0 0.0
    %549 = vmatprep.subr.mxu0 0.0
    %550 = vmatpush2.xpose.msra.mxu0 0.0
    %551 = vmatprep.subr.mxu0 0.0
    %552 = vmatpush2.xpose.msra.mxu0 0.0
    %553 = vmatprep.subr.mxu0 0.0
    %554 = vmatpush2.xpose.msra.mxu0 0.0
    %555 = vmatprep.subr.mxu0 0.0
    %556 = vmatpush2.xpose.msra.mxu0 0.0
    %557 = vmatprep.subr.mxu0 0.0
    %558 = vmatpush2.xpose.msra.mxu0 0.0
    %559 = vmatprep.subr.mxu0 0.0
    %560 = vmatpush2.xpose.msra.mxu0 0.0
    %561 = vmatprep.subr.mxu0 0.0
    %562 = vmatpush2.xpose.msra.mxu0 0.0
    %563 = vmatprep.subr.mxu0 0.0
    %564 = vmatpush2.xpose.msra.mxu0 0.0
    %565 = vmatprep.subr.mxu0 0.0
    %566 = vmatpush2.xpose.msra.mxu0 0.0
    %567 = vmatprep.subr.mxu0 0.0
    %568 = vmatpush2.xpose.msra.mxu0 0.0
    %569 = vmatprep.subr.mxu0 0.0
    %570 = vmatpush2.xpose.msra.mxu0 0.0
    %571 = vmatprep.subr.mxu0 0.0
    %572 = vmatpush2.xpose.msra.mxu0 0.0
    %573 = vmatprep.mubr.f32.mxu0 0.0
    %574 = vmatmul.mubr.f32.gmra.mxu0 %v504
    %v575 = vpop.f32.mrf.mxu0
    %v576 = vadd.f32 0.0, %v575
    %v577 = vpop.f32.mrf.mxu0
    %578 = vdwg.mxu0
    %v580 = vsel %vm46, %v37, 0
    %v583 = vsel %vm46, %v45, 0
    %585 = vmatprep.subr.mxu0 0.0
    %586 = vmatpush1.xpose.msra.mxu0 0.0
    %587 = vmatprep.subr.mxu0 0.0
    %588 = vmatpush1.xpose.msra.mxu0 0.0
    %589 = vmatprep.subr.mxu0 0.0
    %590 = vmatpush1.xpose.msra.mxu0 0.0
    %591 = vmatprep.subr.mxu0 0.0
    %592 = vmatpush1.xpose.msra.mxu0 0.0
    %593 = vmatprep.subr.mxu0 0.0
    %594 = vmatpush1.xpose.msra.mxu0 0.0
    %595 = vmatprep.subr.mxu0 0.0
    %596 = vmatpush1.xpose.msra.mxu0 0.0
    %597 = vmatprep.subr.mxu0 0.0
    %598 = vmatpush1.xpose.msra.mxu0 0.0
    %599 = vmatprep.subr.mxu0 0.0
    %600 = vmatpush1.xpose.msra.mxu0 0.0
    %601 = vmatprep.subr.mxu0 0.0
    %602 = vmatpush1.xpose.msra.mxu0 0.0
    %603 = vmatprep.subr.mxu0 0.0
    %604 = vmatpush1.xpose.msra.mxu0 0.0
    %605 = vmatprep.subr.mxu0 0.0
    %606 = vmatpush1.xpose.msra.mxu0 0.0
    %607 = vmatprep.subr.mxu0 0.0
    %608 = vmatpush1.xpose.msra.mxu0 0.0
    %609 = vmatprep.subr.mxu0 0.0
    %610 = vmatpush1.xpose.msra.mxu0 0.0
    %611 = vmatprep.subr.mxu0 0.0
    %612 = vmatpush1.xpose.msra.mxu0 0.0
    %613 = vmatprep.subr.mxu0 0.0
    %614 = vmatpush1.xpose.msra.mxu0 0.0
    %615 = vmatprep.subr.mxu0 0.0
    %616 = vmatpush1.xpose.msra.mxu0 %v583
    %617 = vmatprep.subr.mxu0 0.0
    %618 = vmatpush2.xpose.msra.mxu0 0.0
    %619 = vmatprep.subr.mxu0 0.0
    %620 = vmatpush2.xpose.msra.mxu0 0.0
    %621 = vmatprep.subr.mxu0 0.0
    %622 = vmatpush2.xpose.msra.mxu0 0.0
    %623 = vmatprep.subr.mxu0 0.0
    %624 = vmatpush2.xpose.msra.mxu0 0.0
    %625 = vmatprep.subr.mxu0 0.0
    %626 = vmatpush2.xpose.msra.mxu0 0.0
    %627 = vmatprep.subr.mxu0 0.0
    %628 = vmatpush2.xpose.msra.mxu0 0.0
    %629 = vmatprep.subr.mxu0 0.0
    %630 = vmatpush2.xpose.msra.mxu0 0.0
    %631 = vmatprep.subr.mxu0 0.0
    %632 = vmatpush2.xpose.msra.mxu0 0.0
    %633 = vmatprep.subr.mxu0 0.0
    %634 = vmatpush2.xpose.msra.mxu0 0.0
    %635 = vmatprep.subr.mxu0 0.0
    %636 = vmatpush2.xpose.msra.mxu0 0.0
    %637 = vmatprep.subr.mxu0 0.0
    %638 = vmatpush2.xpose.msra.mxu0 0.0
    %639 = vmatprep.subr.mxu0 0.0
    %640 = vmatpush2.xpose.msra.mxu0 0.0
    %641 = vmatprep.subr.mxu0 0.0
    %642 = vmatpush2.xpose.msra.mxu0 0.0
    %643 = vmatprep.subr.mxu0 0.0
    %644 = vmatpush2.xpose.msra.mxu0 0.0
    %645 = vmatprep.subr.mxu0 0.0
    %646 = vmatpush2.xpose.msra.mxu0 0.0
    %647 = vmatprep.subr.mxu0 0.0
    %648 = vmatpush2.xpose.msra.mxu0 0.0
    %649 = vmatprep.mubr.f32.mxu0 0.0
    %650 = vmatmul.mubr.f32.gmra.mxu0 %v580
    %v651 = vpop.f32.mrf.mxu0
    %v652 = vadd.f32 0.0, %v651
    %v653 = vpop.f32.mrf.mxu0
    %654 = vdwg.mxu0
    %vm655 = vcmask 57344
    %v656 = vsel %vm655, %v120, -inf
    %657 = vmax.xlane.f32.xlu0 %v656
    %v658 = vpop.xlane.xlu0 %657
    %v659 = vsel %vm655, %v196, -inf
    %660 = vmax.xlane.f32.xlu0 %v659
    %v661 = vpop.xlane.xlu0 %660
    %v662 = vsel %vm655, %v272, -inf
    %663 = vmax.xlane.f32.xlu0 %v662
    %v664 = vpop.xlane.xlu0 %663
    %v665 = vsel %vm655, %v348, -inf
    %666 = vmax.xlane.f32.xlu0 %v665
    %v667 = vpop.xlane.xlu0 %666
    %v668 = vsel %vm655, %v424, -inf
    %669 = vmax.xlane.f32.xlu0 %v668
    %v670 = vpop.xlane.xlu0 %669
    %v671 = vsel %vm655, %v500, -inf
    %672 = vmax.xlane.f32.xlu0 %v671
    %v673 = vpop.xlane.xlu0 %672
    %v674 = vsel %vm655, %v576, -inf
    %675 = vmax.xlane.f32.xlu0 %v674
    %v676 = vpop.xlane.xlu0 %675
    %v677 = vsel %vm655, %v652, -inf
    %678 = vmax.xlane.f32.xlu0 %v677
    %v679 = vpop.xlane.xlu0 %678
    %v680 = vsub.f32 %v120, %v658
    %v681 = vsub.f32 %v196, %v661
    %v682 = vsub.f32 %v272, %v664
    %v683 = vsub.f32 %v348, %v667
    %v684 = vsub.f32 %v424, %v670
    %v685 = vsub.f32 %v500, %v673
    %v686 = vsub.f32 %v576, %v676
    %v687 = vsub.f32 %v652, %v679
    %v688 = vmul.f32 %v680, 1.442695
    %v689 = vpow.pop %v688
    %v690 = vmul.f32 %v681, 1.442695
    %v691 = vpow.pop %v690
    %v692 = vmul.f32 %v682, 1.442695
    %v693 = vpow.pop %v692
    %v694 = vmul.f32 %v683, 1.442695
    %v695 = vpow.pop %v694
    %v696 = vmul.f32 %v684, 1.442695
    %v697 = vpow.pop %v696
    %v698 = vmul.f32 %v685, 1.442695
    %v699 = vpow.pop %v698
    %v700 = vmul.f32 %v686, 1.442695
    %v701 = vpow.pop %v700
    %v702 = vmul.f32 %v687, 1.442695
    %v703 = vpow.pop %v702
    %v704 = vsel %vm655, %v689, 0.0
    %705 = vadd.xlane.f32.xlu0 %v704
    %v706 = vpop.xlane.xlu0 %705
    %v707 = vsel %vm655, %v691, 0.0
    %708 = vadd.xlane.f32.xlu0 %v707
    %v709 = vpop.xlane.xlu0 %708
    %v710 = vsel %vm655, %v693, 0.0
    %711 = vadd.xlane.f32.xlu0 %v710
    %v712 = vpop.xlane.xlu0 %711
    %v713 = vsel %vm655, %v695, 0.0
    %714 = vadd.xlane.f32.xlu0 %v713
    %v715 = vpop.xlane.xlu0 %714
    %v716 = vsel %vm655, %v697, 0.0
    %717 = vadd.xlane.f32.xlu0 %v716
    %v718 = vpop.xlane.xlu0 %717
    %v719 = vsel %vm655, %v699, 0.0
    %720 = vadd.xlane.f32.xlu0 %v719
    %v721 = vpop.xlane.xlu0 %720
    %v722 = vsel %vm655, %v701, 0.0
    %723 = vadd.xlane.f32.xlu0 %v722
    %v724 = vpop.xlane.xlu0 %723
    %v725 = vsel %vm655, %v703, 0.0
    %726 = vadd.xlane.f32.xlu0 %v725
    %v727 = vpop.xlane.xlu0 %726
    %v728 = vrcp.pop %v706
    %v729 = vmul.f32 %v689, %v728
    %v730 = vrcp.pop %v709
    %v731 = vmul.f32 %v691, %v730
    %v732 = vrcp.pop %v712
    %v733 = vmul.f32 %v693, %v732
    %v734 = vrcp.pop %v715
    %v735 = vmul.f32 %v695, %v734
    %v736 = vrcp.pop %v718
    %v737 = vmul.f32 %v697, %v736
    %v738 = vrcp.pop %v721
    %v739 = vmul.f32 %v699, %v738
    %v740 = vrcp.pop %v724
    %v741 = vmul.f32 %v701, %v740
    %v742 = vrcp.pop %v727
    %v743 = vmul.f32 %v703, %v742
    %v744 = vld [vmem:[%s0] sm:$0xff]
    %v745 = vld [vmem:[%s0 + $0x8] sm:$0xff]
    %v746 = vld [vmem:[%s0 + $0x10] sm:$0xff]
    %v747 = vld [vmem:[%s0 + $0x18] sm:$0xff]
    %v748 = vld [vmem:[%s0 + $0x20] sm:$0xff]
    %v749 = vld [vmem:[%s0 + $0x28] sm:$0xff]
    %v750 = vld [vmem:[%s0 + $0x30] sm:$0xff]
    %v751 = vld [vmem:[%s0 + $0x38] sm:$0xff]
    %vm752 = vcmask 64512
    %v754 = vsel %vm752, %v729, 0
    %756 = vmatprep.subr.mxu0 0.0
    %757 = vmatpush1.msra.mxu0 0.0
    %758 = vmatprep.subr.mxu0 0.0
    %759 = vmatpush1.msra.mxu0 0.0
    %760 = vmatprep.subr.mxu0 0.0
    %761 = vmatpush1.msra.mxu0 0.0
    %762 = vmatprep.subr.mxu0 0.0
    %763 = vmatpush1.msra.mxu0 0.0
    %764 = vmatprep.subr.mxu0 0.0
    %765 = vmatpush1.msra.mxu0 0.0
    %766 = vmatprep.subr.mxu0 0.0
    %767 = vmatpush1.msra.mxu0 0.0
    %768 = vmatprep.subr.mxu0 0.0
    %769 = vmatpush1.msra.mxu0 0.0
    %770 = vmatprep.subr.mxu0 0.0
    %771 = vmatpush1.msra.mxu0 0.0
    %772 = vmatprep.subr.mxu0 0.0
    %773 = vmatpush1.msra.mxu0 0.0
    %774 = vmatprep.subr.mxu0 0.0
    %775 = vmatpush1.msra.mxu0 0.0
    %776 = vmatprep.subr.mxu0 0.0
    %777 = vmatpush1.msra.mxu0 0.0
    %778 = vmatprep.subr.mxu0 0.0
    %779 = vmatpush1.msra.mxu0 0.0
    %780 = vmatprep.subr.mxu0 0.0
    %781 = vmatpush1.msra.mxu0 0.0
    %782 = vmatprep.subr.mxu0 0.0
    %783 = vmatpush1.msra.mxu0 0.0
    %784 = vmatprep.subr.mxu0 0.0
    %785 = vmatpush1.msra.mxu0 0.0
    %786 = vmatprep.subr.mxu0 0.0
    %787 = vmatpush1.msra.mxu0 %v744
    %788 = vmatprep.subr.mxu0 0.0
    %789 = vmatpush2.msra.mxu0 0.0
    %790 = vmatprep.subr.mxu0 0.0
    %791 = vmatpush2.msra.mxu0 0.0
    %792 = vmatprep.subr.mxu0 0.0
    %793 = vmatpush2.msra.mxu0 0.0
    %794 = vmatprep.subr.mxu0 0.0
    %795 = vmatpush2.msra.mxu0 0.0
    %796 = vmatprep.subr.mxu0 0.0
    %797 = vmatpush2.msra.mxu0 0.0
    %798 = vmatprep.subr.mxu0 0.0
    %799 = vmatpush2.msra.mxu0 0.0
    %800 = vmatprep.subr.mxu0 0.0
    %801 = vmatpush2.msra.mxu0 0.0
    %802 = vmatprep.subr.mxu0 0.0
    %803 = vmatpush2.msra.mxu0 0.0
    %804 = vmatprep.subr.mxu0 0.0
    %805 = vmatpush2.msra.mxu0 0.0
    %806 = vmatprep.subr.mxu0 0.0
    %807 = vmatpush2.msra.mxu0 0.0
    %808 = vmatprep.subr.mxu0 0.0
    %809 = vmatpush2.msra.mxu0 0.0
    %810 = vmatprep.subr.mxu0 0.0
    %811 = vmatpush2.msra.mxu0 0.0
    %812 = vmatprep.subr.mxu0 0.0
    %813 = vmatpush2.msra.mxu0 0.0
    %814 = vmatprep.subr.mxu0 0.0
    %815 = vmatpush2.msra.mxu0 0.0
    %816 = vmatprep.subr.mxu0 0.0
    %817 = vmatpush2.msra.mxu0 0.0
    %818 = vmatprep.subr.mxu0 0.0
    %819 = vmatpush2.msra.mxu0 0.0
    %820 = vmatprep.mubr.f32.mxu0 0.0
    %821 = vmatmul.mubr.f32.gmra.mxu0 %v754
    %v822 = vpop.f32.mrf.mxu0
    %v823 = vadd.f32 0.0, %v822
    %v824 = vpop.f32.mrf.mxu0
    %825 = vdwg.mxu0
    %v827 = vsel %vm752, %v731, 0
    %829 = vmatprep.subr.mxu0 0.0
    %830 = vmatpush1.msra.mxu0 0.0
    %831 = vmatprep.subr.mxu0 0.0
    %832 = vmatpush1.msra.mxu0 0.0
    %833 = vmatprep.subr.mxu0 0.0
    %834 = vmatpush1.msra.mxu0 0.0
    %835 = vmatprep.subr.mxu0 0.0
    %836 = vmatpush1.msra.mxu0 0.0
    %837 = vmatprep.subr.mxu0 0.0
    %838 = vmatpush1.msra.mxu0 0.0
    %839 = vmatprep.subr.mxu0 0.0
    %840 = vmatpush1.msra.mxu0 0.0
    %841 = vmatprep.subr.mxu0 0.0
    %842 = vmatpush1.msra.mxu0 0.0
    %843 = vmatprep.subr.mxu0 0.0
    %844 = vmatpush1.msra.mxu0 0.0
    %845 = vmatprep.subr.mxu0 0.0
    %846 = vmatpush1.msra.mxu0 0.0
    %847 = vmatprep.subr.mxu0 0.0
    %848 = vmatpush1.msra.mxu0 0.0
    %849 = vmatprep.subr.mxu0 0.0
    %850 = vmatpush1.msra.mxu0 0.0
    %851 = vmatprep.subr.mxu0 0.0
    %852 = vmatpush1.msra.mxu0 0.0
    %853 = vmatprep.subr.mxu0 0.0
    %854 = vmatpush1.msra.mxu0 0.0
    %855 = vmatprep.subr.mxu0 0.0
    %856 = vmatpush1.msra.mxu0 0.0
    %857 = vmatprep.subr.mxu0 0.0
    %858 = vmatpush1.msra.mxu0 0.0
    %859 = vmatprep.subr.mxu0 0.0
    %860 = vmatpush1.msra.mxu0 %v745
    %861 = vmatprep.subr.mxu0 0.0
    %862 = vmatpush2.msra.mxu0 0.0
    %863 = vmatprep.subr.mxu0 0.0
    %864 = vmatpush2.msra.mxu0 0.0
    %865 = vmatprep.subr.mxu0 0.0
    %866 = vmatpush2.msra.mxu0 0.0
    %867 = vmatprep.subr.mxu0 0.0
    %868 = vmatpush2.msra.mxu0 0.0
    %869 = vmatprep.subr.mxu0 0.0
    %870 = vmatpush2.msra.mxu0 0.0
    %871 = vmatprep.subr.mxu0 0.0
    %872 = vmatpush2.msra.mxu0 0.0
    %873 = vmatprep.subr.mxu0 0.0
    %874 = vmatpush2.msra.mxu0 0.0
    %875 = vmatprep.subr.mxu0 0.0
    %876 = vmatpush2.msra.mxu0 0.0
    %877 = vmatprep.subr.mxu0 0.0
    %878 = vmatpush2.msra.mxu0 0.0
    %879 = vmatprep.subr.mxu0 0.0
    %880 = vmatpush2.msra.mxu0 0.0
    %881 = vmatprep.subr.mxu0 0.0
    %882 = vmatpush2.msra.mxu0 0.0
    %883 = vmatprep.subr.mxu0 0.0
    %884 = vmatpush2.msra.mxu0 0.0
    %885 = vmatprep.subr.mxu0 0.0
    %886 = vmatpush2.msra.mxu0 0.0
    %887 = vmatprep.subr.mxu0 0.0
    %888 = vmatpush2.msra.mxu0 0.0
    %889 = vmatprep.subr.mxu0 0.0
    %890 = vmatpush2.msra.mxu0 0.0
    %891 = vmatprep.subr.mxu0 0.0
    %892 = vmatpush2.msra.mxu0 0.0
    %893 = vmatprep.mubr.f32.mxu0 0.0
    %894 = vmatmul.mubr.f32.gmra.mxu0 %v827
    %v895 = vpop.f32.mrf.mxu0
    %v896 = vadd.f32 0.0, %v895
    %v897 = vpop.f32.mrf.mxu0
    %898 = vdwg.mxu0
    %v900 = vsel %vm752, %v733, 0
    %902 = vmatprep.subr.mxu0 0.0
    %903 = vmatpush1.msra.mxu0 0.0
    %904 = vmatprep.subr.mxu0 0.0
    %905 = vmatpush1.msra.mxu0 0.0
    %906 = vmatprep.subr.mxu0 0.0
    %907 = vmatpush1.msra.mxu0 0.0
    %908 = vmatprep.subr.mxu0 0.0
    %909 = vmatpush1.msra.mxu0 0.0
    %910 = vmatprep.subr.mxu0 0.0
    %911 = vmatpush1.msra.mxu0 0.0
    %912 = vmatprep.subr.mxu0 0.0
    %913 = vmatpush1.msra.mxu0 0.0
    %914 = vmatprep.subr.mxu0 0.0
    %915 = vmatpush1.msra.mxu0 0.0
    %916 = vmatprep.subr.mxu0 0.0
    %917 = vmatpush1.msra.mxu0 0.0
    %918 = vmatprep.subr.mxu0 0.0
    %919 = vmatpush1.msra.mxu0 0.0
    %920 = vmatprep.subr.mxu0 0.0
    %921 = vmatpush1.msra.mxu0 0.0
    %922 = vmatprep.subr.mxu0 0.0
    %923 = vmatpush1.msra.mxu0 0.0
    %924 = vmatprep.subr.mxu0 0.0
    %925 = vmatpush1.msra.mxu0 0.0
    %926 = vmatprep.subr.mxu0 0.0
    %927 = vmatpush1.msra.mxu0 0.0
    %928 = vmatprep.subr.mxu0 0.0
    %929 = vmatpush1.msra.mxu0 0.0
    %930 = vmatprep.subr.mxu0 0.0
    %931 = vmatpush1.msra.mxu0 0.0
    %932 = vmatprep.subr.mxu0 0.0
    %933 = vmatpush1.msra.mxu0 %v746
    %934 = vmatprep.subr.mxu0 0.0
    %935 = vmatpush2.msra.mxu0 0.0
    %936 = vmatprep.subr.mxu0 0.0
    %937 = vmatpush2.msra.mxu0 0.0
    %938 = vmatprep.subr.mxu0 0.0
    %939 = vmatpush2.msra.mxu0 0.0
    %940 = vmatprep.subr.mxu0 0.0
    %941 = vmatpush2.msra.mxu0 0.0
    %942 = vmatprep.subr.mxu0 0.0
    %943 = vmatpush2.msra.mxu0 0.0
    %944 = vmatprep.subr.mxu0 0.0
    %945 = vmatpush2.msra.mxu0 0.0
    %946 = vmatprep.subr.mxu0 0.0
    %947 = vmatpush2.msra.mxu0 0.0
    %948 = vmatprep.subr.mxu0 0.0
    %949 = vmatpush2.msra.mxu0 0.0
    %950 = vmatprep.subr.mxu0 0.0
    %951 = vmatpush2.msra.mxu0 0.0
    %952 = vmatprep.subr.mxu0 0.0
    %953 = vmatpush2.msra.mxu0 0.0
    %954 = vmatprep.subr.mxu0 0.0
    %955 = vmatpush2.msra.mxu0 0.0
    %956 = vmatprep.subr.mxu0 0.0
    %957 = vmatpush2.msra.mxu0 0.0
    %958 = vmatprep.subr.mxu0 0.0
    %959 = vmatpush2.msra.mxu0 0.0
    %960 = vmatprep.subr.mxu0 0.0
    %961 = vmatpush2.msra.mxu0 0.0
    %962 = vmatprep.subr.mxu0 0.0
    %963 = vmatpush2.msra.mxu0 0.0
    %964 = vmatprep.subr.mxu0 0.0
    %965 = vmatpush2.msra.mxu0 0.0
    %966 = vmatprep.mubr.f32.mxu0 0.0
    %967 = vmatmul.mubr.f32.gmra.mxu0 %v900
    %v968 = vpop.f32.mrf.mxu0
    %v969 = vadd.f32 0.0, %v968
    %v970 = vpop.f32.mrf.mxu0
    %971 = vdwg.mxu0
    %v973 = vsel %vm752, %v735, 0
    %975 = vmatprep.subr.mxu0 0.0
    %976 = vmatpush1.msra.mxu0 0.0
    %977 = vmatprep.subr.mxu0 0.0
    %978 = vmatpush1.msra.mxu0 0.0
    %979 = vmatprep.subr.mxu0 0.0
    %980 = vmatpush1.msra.mxu0 0.0
    %981 = vmatprep.subr.mxu0 0.0
    %982 = vmatpush1.msra.mxu0 0.0
    %983 = vmatprep.subr.mxu0 0.0
    %984 = vmatpush1.msra.mxu0 0.0
    %985 = vmatprep.subr.mxu0 0.0
    %986 = vmatpush1.msra.mxu0 0.0
    %987 = vmatprep.subr.mxu0 0.0
    %988 = vmatpush1.msra.mxu0 0.0
    %989 = vmatprep.subr.mxu0 0.0
    %990 = vmatpush1.msra.mxu0 0.0
    %991 = vmatprep.subr.mxu0 0.0
    %992 = vmatpush1.msra.mxu0 0.0
    %993 = vmatprep.subr.mxu0 0.0
    %994 = vmatpush1.msra.mxu0 0.0
    %995 = vmatprep.subr.mxu0 0.0
    %996 = vmatpush1.msra.mxu0 0.0
    %997 = vmatprep.subr.mxu0 0.0
    %998 = vmatpush1.msra.mxu0 0.0
    %999 = vmatprep.subr.mxu0 0.0
    %1000 = vmatpush1.msra.mxu0 0.0
    %1001 = vmatprep.subr.mxu0 0.0
    %1002 = vmatpush1.msra.mxu0 0.0
    %1003 = vmatprep.subr.mxu0 0.0
    %1004 = vmatpush1.msra.mxu0 0.0
    %1005 = vmatprep.subr.mxu0 0.0
    %1006 = vmatpush1.msra.mxu0 %v747
    %1007 = vmatprep.subr.mxu0 0.0
    %1008 = vmatpush2.msra.mxu0 0.0
    %1009 = vmatprep.subr.mxu0 0.0
    %1010 = vmatpush2.msra.mxu0 0.0
    %1011 = vmatprep.subr.mxu0 0.0
    %1012 = vmatpush2.msra.mxu0 0.0
    %1013 = vmatprep.subr.mxu0 0.0
    %1014 = vmatpush2.msra.mxu0 0.0
    %1015 = vmatprep.subr.mxu0 0.0
    %1016 = vmatpush2.msra.mxu0 0.0
    %1017 = vmatprep.subr.mxu0 0.0
    %1018 = vmatpush2.msra.mxu0 0.0
    %1019 = vmatprep.subr.mxu0 0.0
    %1020 = vmatpush2.msra.mxu0 0.0
    %1021 = vmatprep.subr.mxu0 0.0
    %1022 = vmatpush2.msra.mxu0 0.0
    %1023 = vmatprep.subr.mxu0 0.0
    %1024 = vmatpush2.msra.mxu0 0.0
    %1025 = vmatprep.subr.mxu0 0.0
    %1026 = vmatpush2.msra.mxu0 0.0
    %1027 = vmatprep.subr.mxu0 0.0
    %1028 = vmatpush2.msra.mxu0 0.0
    %1029 = vmatprep.subr.mxu0 0.0
    %1030 = vmatpush2.msra.mxu0 0.0
    %1031 = vmatprep.subr.mxu0 0.0
    %1032 = vmatpush2.msra.mxu0 0.0
    %1033 = vmatprep.subr.mxu0 0.0
    %1034 = vmatpush2.msra.mxu0 0.0
    %1035 = vmatprep.subr.mxu0 0.0
    %1036 = vmatpush2.msra.mxu0 0.0
    %1037 = vmatprep.subr.mxu0 0.0
    %1038 = vmatpush2.msra.mxu0 0.0
    %1039 = vmatprep.mubr.f32.mxu0 0.0
    %1040 = vmatmul.mubr.f32.gmra.mxu0 %v973
    %v1041 = vpop.f32.mrf.mxu0
    %v1042 = vadd.f32 0.0, %v1041
    %v1043 = vpop.f32.mrf.mxu0
    %1044 = vdwg.mxu0
    %v1046 = vsel %vm752, %v737, 0
    %1048 = vmatprep.subr.mxu0 0.0
    %1049 = vmatpush1.msra.mxu0 0.0
    %1050 = vmatprep.subr.mxu0 0.0
    %1051 = vmatpush1.msra.mxu0 0.0
    %1052 = vmatprep.subr.mxu0 0.0
    %1053 = vmatpush1.msra.mxu0 0.0
    %1054 = vmatprep.subr.mxu0 0.0
    %1055 = vmatpush1.msra.mxu0 0.0
    %1056 = vmatprep.subr.mxu0 0.0
    %1057 = vmatpush1.msra.mxu0 0.0
    %1058 = vmatprep.subr.mxu0 0.0
    %1059 = vmatpush1.msra.mxu0 0.0
    %1060 = vmatprep.subr.mxu0 0.0
    %1061 = vmatpush1.msra.mxu0 0.0
    %1062 = vmatprep.subr.mxu0 0.0
    %1063 = vmatpush1.msra.mxu0 0.0
    %1064 = vmatprep.subr.mxu0 0.0
    %1065 = vmatpush1.msra.mxu0 0.0
    %1066 = vmatprep.subr.mxu0 0.0
    %1067 = vmatpush1.msra.mxu0 0.0
    %1068 = vmatprep.subr.mxu0 0.0
    %1069 = vmatpush1.msra.mxu0 0.0
    %1070 = vmatprep.subr.mxu0 0.0
    %1071 = vmatpush1.msra.mxu0 0.0
    %1072 = vmatprep.subr.mxu0 0.0
    %1073 = vmatpush1.msra.mxu0 0.0
    %1074 = vmatprep.subr.mxu0 0.0
    %1075 = vmatpush1.msra.mxu0 0.0
    %1076 = vmatprep.subr.mxu0 0.0
    %1077 = vmatpush1.msra.mxu0 0.0
    %1078 = vmatprep.subr.mxu0 0.0
    %1079 = vmatpush1.msra.mxu0 %v748
    %1080 = vmatprep.subr.mxu0 0.0
    %1081 = vmatpush2.msra.mxu0 0.0
    %1082 = vmatprep.subr.mxu0 0.0
    %1083 = vmatpush2.msra.mxu0 0.0
    %1084 = vmatprep.subr.mxu0 0.0
    %1085 = vmatpush2.msra.mxu0 0.0
    %1086 = vmatprep.subr.mxu0 0.0
    %1087 = vmatpush2.msra.mxu0 0.0
    %1088 = vmatprep.subr.mxu0 0.0
    %1089 = vmatpush2.msra.mxu0 0.0
    %1090 = vmatprep.subr.mxu0 0.0
    %1091 = vmatpush2.msra.mxu0 0.0
    %1092 = vmatprep.subr.mxu0 0.0
    %1093 = vmatpush2.msra.mxu0 0.0
    %1094 = vmatprep.subr.mxu0 0.0
    %1095 = vmatpush2.msra.mxu0 0.0
    %1096 = vmatprep.subr.mxu0 0.0
    %1097 = vmatpush2.msra.mxu0 0.0
    %1098 = vmatprep.subr.mxu0 0.0
    %1099 = vmatpush2.msra.mxu0 0.0
    %1100 = vmatprep.subr.mxu0 0.0
    %1101 = vmatpush2.msra.mxu0 0.0
    %1102 = vmatprep.subr.mxu0 0.0
    %1103 = vmatpush2.msra.mxu0 0.0
    %1104 = vmatprep.subr.mxu0 0.0
    %1105 = vmatpush2.msra.mxu0 0.0
    %1106 = vmatprep.subr.mxu0 0.0
    %1107 = vmatpush2.msra.mxu0 0.0
    %1108 = vmatprep.subr.mxu0 0.0
    %1109 = vmatpush2.msra.mxu0 0.0
    %1110 = vmatprep.subr.mxu0 0.0
    %1111 = vmatpush2.msra.mxu0 0.0
    %1112 = vmatprep.mubr.f32.mxu0 0.0
    %1113 = vmatmul.mubr.f32.gmra.mxu0 %v1046
    %v1114 = vpop.f32.mrf.mxu0
    %v1115 = vadd.f32 0.0, %v1114
    %v1116 = vpop.f32.mrf.mxu0
    %1117 = vdwg.mxu0
    %v1119 = vsel %vm752, %v739, 0
    %1121 = vmatprep.subr.mxu0 0.0
    %1122 = vmatpush1.msra.mxu0 0.0
    %1123 = vmatprep.subr.mxu0 0.0
    %1124 = vmatpush1.msra.mxu0 0.0
    %1125 = vmatprep.subr.mxu0 0.0
    %1126 = vmatpush1.msra.mxu0 0.0
    %1127 = vmatprep.subr.mxu0 0.0
    %1128 = vmatpush1.msra.mxu0 0.0
    %1129 = vmatprep.subr.mxu0 0.0
    %1130 = vmatpush1.msra.mxu0 0.0
    %1131 = vmatprep.subr.mxu0 0.0
    %1132 = vmatpush1.msra.mxu0 0.0
    %1133 = vmatprep.subr.mxu0 0.0
    %1134 = vmatpush1.msra.mxu0 0.0
    %1135 = vmatprep.subr.mxu0 0.0
    %1136 = vmatpush1.msra.mxu0 0.0
    %1137 = vmatprep.subr.mxu0 0.0
    %1138 = vmatpush1.msra.mxu0 0.0
    %1139 = vmatprep.subr.mxu0 0.0
    %1140 = vmatpush1.msra.mxu0 0.0
    %1141 = vmatprep.subr.mxu0 0.0
    %1142 = vmatpush1.msra.mxu0 0.0
    %1143 = vmatprep.subr.mxu0 0.0
    %1144 = vmatpush1.msra.mxu0 0.0
    %1145 = vmatprep.subr.mxu0 0.0
    %1146 = vmatpush1.msra.mxu0 0.0
    %1147 = vmatprep.subr.mxu0 0.0
    %1148 = vmatpush1.msra.mxu0 0.0
    %1149 = vmatprep.subr.mxu0 0.0
    %1150 = vmatpush1.msra.mxu0 0.0
    %1151 = vmatprep.subr.mxu0 0.0
    %1152 = vmatpush1.msra.mxu0 %v749
    %1153 = vmatprep.subr.mxu0 0.0
    %1154 = vmatpush2.msra.mxu0 0.0
    %1155 = vmatprep.subr.mxu0 0.0
    %1156 = vmatpush2.msra.mxu0 0.0
    %1157 = vmatprep.subr.mxu0 0.0
    %1158 = vmatpush2.msra.mxu0 0.0
    %1159 = vmatprep.subr.mxu0 0.0
    %1160 = vmatpush2.msra.mxu0 0.0
    %1161 = vmatprep.subr.mxu0 0.0
    %1162 = vmatpush2.msra.mxu0 0.0
    %1163 = vmatprep.subr.mxu0 0.0
    %1164 = vmatpush2.msra.mxu0 0.0
    %1165 = vmatprep.subr.mxu0 0.0
    %1166 = vmatpush2.msra.mxu0 0.0
    %1167 = vmatprep.subr.mxu0 0.0
    %1168 = vmatpush2.msra.mxu0 0.0
    %1169 = vmatprep.subr.mxu0 0.0
    %1170 = vmatpush2.msra.mxu0 0.0
    %1171 = vmatprep.subr.mxu0 0.0
    %1172 = vmatpush2.msra.mxu0 0.0
    %1173 = vmatprep.subr.mxu0 0.0
    %1174 = vmatpush2.msra.mxu0 0.0
    %1175 = vmatprep.subr.mxu0 0.0
    %1176 = vmatpush2.msra.mxu0 0.0
    %1177 = vmatprep.subr.mxu0 0.0
    %1178 = vmatpush2.msra.mxu0 0.0
    %1179 = vmatprep.subr.mxu0 0.0
    %1180 = vmatpush2.msra.mxu0 0.0
    %1181 = vmatprep.subr.mxu0 0.0
    %1182 = vmatpush2.msra.mxu0 0.0
    %1183 = vmatprep.subr.mxu0 0.0
    %1184 = vmatpush2.msra.mxu0 0.0
    %1185 = vmatprep.mubr.f32.mxu0 0.0
    %1186 = vmatmul.mubr.f32.gmra.mxu0 %v1119
    %v1187 = vpop.f32.mrf.mxu0
    %v1188 = vadd.f32 0.0, %v1187
    %v1189 = vpop.f32.mrf.mxu0
    %1190 = vdwg.mxu0
    %v1192 = vsel %vm752, %v741, 0
    %1194 = vmatprep.subr.mxu0 0.0
    %1195 = vmatpush1.msra.mxu0 0.0
    %1196 = vmatprep.subr.mxu0 0.0
    %1197 = vmatpush1.msra.mxu0 0.0
    %1198 = vmatprep.subr.mxu0 0.0
    %1199 = vmatpush1.msra.mxu0 0.0
    %1200 = vmatprep.subr.mxu0 0.0
    %1201 = vmatpush1.msra.mxu0 0.0
    %1202 = vmatprep.subr.mxu0 0.0
    %1203 = vmatpush1.msra.mxu0 0.0
    %1204 = vmatprep.subr.mxu0 0.0
    %1205 = vmatpush1.msra.mxu0 0.0
    %1206 = vmatprep.subr.mxu0 0.0
    %1207 = vmatpush1.msra.mxu0 0.0
    %1208 = vmatprep.subr.mxu0 0.0
    %1209 = vmatpush1.msra.mxu0 0.0
    %1210 = vmatprep.subr.mxu0 0.0
    %1211 = vmatpush1.msra.mxu0 0.0
    %1212 = vmatprep.subr.mxu0 0.0
    %1213 = vmatpush1.msra.mxu0 0.0
    %1214 = vmatprep.subr.mxu0 0.0
    %1215 = vmatpush1.msra.mxu0 0.0
    %1216 = vmatprep.subr.mxu0 0.0
    %1217 = vmatpush1.msra.mxu0 0.0
    %1218 = vmatprep.subr.mxu0 0.0
    %1219 = vmatpush1.msra.mxu0 0.0
    %1220 = vmatprep.subr.mxu0 0.0
    %1221 = vmatpush1.msra.mxu0 0.0
    %1222 = vmatprep.subr.mxu0 0.0
    %1223 = vmatpush1.msra.mxu0 0.0
    %1224 = vmatprep.subr.mxu0 0.0
    %1225 = vmatpush1.msra.mxu0 %v750
    %1226 = vmatprep.subr.mxu0 0.0
    %1227 = vmatpush2.msra.mxu0 0.0
    %1228 = vmatprep.subr.mxu0 0.0
    %1229 = vmatpush2.msra.mxu0 0.0
    %1230 = vmatprep.subr.mxu0 0.0
    %1231 = vmatpush2.msra.mxu0 0.0
    %1232 = vmatprep.subr.mxu0 0.0
    %1233 = vmatpush2.msra.mxu0 0.0
    %1234 = vmatprep.subr.mxu0 0.0
    %1235 = vmatpush2.msra.mxu0 0.0
    %1236 = vmatprep.subr.mxu0 0.0
    %1237 = vmatpush2.msra.mxu0 0.0
    %1238 = vmatprep.subr.mxu0 0.0
    %1239 = vmatpush2.msra.mxu0 0.0
    %1240 = vmatprep.subr.mxu0 0.0
    %1241 = vmatpush2.msra.mxu0 0.0
    %1242 = vmatprep.subr.mxu0 0.0
    %1243 = vmatpush2.msra.mxu0 0.0
    %1244 = vmatprep.subr.mxu0 0.0
    %1245 = vmatpush2.msra.mxu0 0.0
    %1246 = vmatprep.subr.mxu0 0.0
    %1247 = vmatpush2.msra.mxu0 0.0
    %1248 = vmatprep.subr.mxu0 0.0
    %1249 = vmatpush2.msra.mxu0 0.0
    %1250 = vmatprep.subr.mxu0 0.0
    %1251 = vmatpush2.msra.mxu0 0.0
    %1252 = vmatprep.subr.mxu0 0.0
    %1253 = vmatpush2.msra.mxu0 0.0
    %1254 = vmatprep.subr.mxu0 0.0
    %1255 = vmatpush2.msra.mxu0 0.0
    %1256 = vmatprep.subr.mxu0 0.0
    %1257 = vmatpush2.msra.mxu0 0.0
    %1258 = vmatprep.mubr.f32.mxu0 0.0
    %1259 = vmatmul.mubr.f32.gmra.mxu0 %v1192
    %v1260 = vpop.f32.mrf.mxu0
    %v1261 = vadd.f32 0.0, %v1260
    %v1262 = vpop.f32.mrf.mxu0
    %1263 = vdwg.mxu0
    %v1265 = vsel %vm752, %v743, 0
    %1267 = vmatprep.subr.mxu0 0.0
    %1268 = vmatpush1.msra.mxu0 0.0
    %1269 = vmatprep.subr.mxu0 0.0
    %1270 = vmatpush1.msra.mxu0 0.0
    %1271 = vmatprep.subr.mxu0 0.0
    %1272 = vmatpush1.msra.mxu0 0.0
    %1273 = vmatprep.subr.mxu0 0.0
    %1274 = vmatpush1.msra.mxu0 0.0
    %1275 = vmatprep.subr.mxu0 0.0
    %1276 = vmatpush1.msra.mxu0 0.0
    %1277 = vmatprep.subr.mxu0 0.0
    %1278 = vmatpush1.msra.mxu0 0.0
    %1279 = vmatprep.subr.mxu0 0.0
    %1280 = vmatpush1.msra.mxu0 0.0
    %1281 = vmatprep.subr.mxu0 0.0
    %1282 = vmatpush1.msra.mxu0 0.0
    %1283 = vmatprep.subr.mxu0 0.0
    %1284 = vmatpush1.msra.mxu0 0.0
    %1285 = vmatprep.subr.mxu0 0.0
    %1286 = vmatpush1.msra.mxu0 0.0
    %1287 = vmatprep.subr.mxu0 0.0
    %1288 = vmatpush1.msra.mxu0 0.0
    %1289 = vmatprep.subr.mxu0 0.0
    %1290 = vmatpush1.msra.mxu0 0.0
    %1291 = vmatprep.subr.mxu0 0.0
    %1292 = vmatpush1.msra.mxu0 0.0
    %1293 = vmatprep.subr.mxu0 0.0
    %1294 = vmatpush1.msra.mxu0 0.0
    %1295 = vmatprep.subr.mxu0 0.0
    %1296 = vmatpush1.msra.mxu0 0.0
    %1297 = vmatprep.subr.mxu0 0.0
    %1298 = vmatpush1.msra.mxu0 %v751
    %1299 = vmatprep.subr.mxu0 0.0
    %1300 = vmatpush2.msra.mxu0 0.0
    %1301 = vmatprep.subr.mxu0 0.0
    %1302 = vmatpush2.msra.mxu0 0.0
    %1303 = vmatprep.subr.mxu0 0.0
    %1304 = vmatpush2.msra.mxu0 0.0
    %1305 = vmatprep.subr.mxu0 0.0
    %1306 = vmatpush2.msra.mxu0 0.0
    %1307 = vmatprep.subr.mxu0 0.0
    %1308 = vmatpush2.msra.mxu0 0.0
    %1309 = vmatprep.subr.mxu0 0.0
    %1310 = vmatpush2.msra.mxu0 0.0
    %1311 = vmatprep.subr.mxu0 0.0
    %1312 = vmatpush2.msra.mxu0 0.0
    %1313 = vmatprep.subr.mxu0 0.0
    %1314 = vmatpush2.msra.mxu0 0.0
    %1315 = vmatprep.subr.mxu0 0.0
    %1316 = vmatpush2.msra.mxu0 0.0
    %1317 = vmatprep.subr.mxu0 0.0
    %1318 = vmatpush2.msra.mxu0 0.0
    %1319 = vmatprep.subr.mxu0 0.0
    %1320 = vmatpush2.msra.mxu0 0.0
    %1321 = vmatprep.subr.mxu0 0.0
    %1322 = vmatpush2.msra.mxu0 0.0
    %1323 = vmatprep.subr.mxu0 0.0
    %1324 = vmatpush2.msra.mxu0 0.0
    %1325 = vmatprep.subr.mxu0 0.0
    %1326 = vmatpush2.msra.mxu0 0.0
    %1327 = vmatprep.subr.mxu0 0.0
    %1328 = vmatpush2.msra.mxu0 0.0
    %1329 = vmatprep.subr.mxu0 0.0
    %1330 = vmatpush2.msra.mxu0 0.0
    %1331 = vmatprep.mubr.f32.mxu0 0.0
    %1332 = vmatmul.mubr.f32.gmra.mxu0 %v1265
    %v1333 = vpop.f32.mrf.mxu0
    %v1334 = vadd.f32 0.0, %v1333
    %v1335 = vpop.f32.mrf.mxu0
    %1336 = vdwg.mxu0
    %v1337 = vadd.f32 %v823, 0.0
    %v1338 = vadd.f32 %v896, 0.0
    %v1339 = vadd.f32 %v969, 0.0
    %v1340 = vadd.f32 %v1042, 0.0
    %v1341 = vadd.f32 %v1115, 0.0
    %v1342 = vadd.f32 %v1188, 0.0
    %v1343 = vadd.f32 %v1261, 0.0
    %v1344 = vadd.f32 %v1334, 0.0
    %v1345 = vld [vmem:[%s1] sm:$0xff]
    %v1346 = vtanh.pop %v1345
    %v1347 = vmax.f32 %v1346, 0.0
    %v1348 = vtanh.pop %v1337
    %v1349 = vtanh.pop %v1338
    %v1350 = vtanh.pop %v1339
    %v1351 = vtanh.pop %v1340
    %v1352 = vtanh.pop %v1341
    %v1353 = vtanh.pop %v1342
    %v1354 = vtanh.pop %v1343
    %v1355 = vtanh.pop %v1344
    %v1356 = vmax.f32 %v1348, 0.0
    %v1357 = vmax.f32 %v1349, 0.0
    %v1358 = vmax.f32 %v1350, 0.0
    %v1359 = vmax.f32 %v1351, 0.0
    %v1360 = vmax.f32 %v1352, 0.0
    %v1361 = vmax.f32 %v1353, 0.0
    %v1362 = vmax.f32 %v1354, 0.0
    %v1363 = vmax.f32 %v1355, 0.0
    %v1364 = vld [vmem:[%s3] sm:$0xff]
    %v1365 = vld [vmem:[%s3 + $0x8] sm:$0xff]
    %v1366 = vld [vmem:[%s3 + $0x10] sm:$0xff]
    %v1367 = vld [vmem:[%s3 + $0x18] sm:$0xff]
    %v1368 = vld [vmem:[%s3 + $0x20] sm:$0xff]
    %v1369 = vld [vmem:[%s3 + $0x28] sm:$0xff]
    %v1370 = vld [vmem:[%s3 + $0x30] sm:$0xff]
    %v1371 = vld [vmem:[%s3 + $0x38] sm:$0xff]
    %v1372 = vld [vmem:[%s4] sm:$0xff]
    %v1373 = vld [vmem:[%s4 + $0x8] sm:$0xff]
    %v1374 = vld [vmem:[%s4 + $0x10] sm:$0xff]
    %v1375 = vld [vmem:[%s4 + $0x18] sm:$0xff]
    %v1376 = vld [vmem:[%s4 + $0x20] sm:$0xff]
    %v1377 = vld [vmem:[%s4 + $0x28] sm:$0xff]
    %v1378 = vld [vmem:[%s4 + $0x30] sm:$0xff]
    %v1379 = vld [vmem:[%s4 + $0x38] sm:$0xff]
    %v1388 = vrot.slane %v1357, 7
    %vm1389 = vcmask 1041409
    %v1390 = vsel %vm1389, %v1388, %v1356
    %v1391 = vrot.slane %v1358, 6
    %vm1392 = vcmask 1042434
    %v1393 = vsel %vm1392, %v1391, %v1390
    %v1394 = vrot.slane %v1359, 5
    %vm1395 = vcmask 1043459
    %v1396 = vsel %vm1395, %v1394, %v1393
    %v1397 = vrot.slane %v1360, 4
    %vm1398 = vcmask 1044484
    %v1399 = vsel %vm1398, %v1397, %v1396
    %v1400 = vrot.slane %v1361, 3
    %vm1401 = vcmask 1045509
    %v1402 = vsel %vm1401, %v1400, %v1399
    %v1403 = vrot.slane %v1362, 2
    %vm1404 = vcmask 1046534
    %v1405 = vsel %vm1404, %v1403, %v1402
    %v1406 = vrot.slane %v1363, 1
    %vm1407 = vcmask 1047559
    %v1408 = vsel %vm1407, %v1406, %v1405
    %v1409 = vsel %vm46, %v1408, 0
    %1411 = vmatprep.subr.mxu0 0.0
    %1412 = vmatpush1.msra.mxu0 0.0
    %1413 = vmatprep.subr.mxu0 0.0
    %1414 = vmatpush1.msra.mxu0 0.0
    %1415 = vmatprep.subr.mxu0 0.0
    %1416 = vmatpush1.msra.mxu0 0.0
    %1417 = vmatprep.subr.mxu0 0.0
    %1418 = vmatpush1.msra.mxu0 0.0
    %1419 = vmatprep.subr.mxu0 0.0
    %1420 = vmatpush1.msra.mxu0 0.0
    %1421 = vmatprep.subr.mxu0 0.0
    %1422 = vmatpush1.msra.mxu0 0.0
    %1423 = vmatprep.subr.mxu0 0.0
    %1424 = vmatpush1.msra.mxu0 0.0
    %1425 = vmatprep.subr.mxu0 0.0
    %1426 = vmatpush1.msra.mxu0 0.0
    %1427 = vmatprep.subr.mxu0 0.0
    %1428 = vmatpush1.msra.mxu0 %v1379
    %1429 = vmatprep.subr.mxu0 0.0
    %1430 = vmatpush1.msra.mxu0 %v1378
    %1431 = vmatprep.subr.mxu0 0.0
    %1432 = vmatpush1.msra.mxu0 %v1377
    %1433 = vmatprep.subr.mxu0 0.0
    %1434 = vmatpush1.msra.mxu0 %v1376
    %1435 = vmatprep.subr.mxu0 0.0
    %1436 = vmatpush1.msra.mxu0 %v1375
    %1437 = vmatprep.subr.mxu0 0.0
    %1438 = vmatpush1.msra.mxu0 %v1374
    %1439 = vmatprep.subr.mxu0 0.0
    %1440 = vmatpush1.msra.mxu0 %v1373
    %1441 = vmatprep.subr.mxu0 0.0
    %1442 = vmatpush1.msra.mxu0 %v1372
    %1443 = vmatprep.subr.mxu0 0.0
    %1444 = vmatpush2.msra.mxu0 0.0
    %1445 = vmatprep.subr.mxu0 0.0
    %1446 = vmatpush2.msra.mxu0 0.0
    %1447 = vmatprep.subr.mxu0 0.0
    %1448 = vmatpush2.msra.mxu0 0.0
    %1449 = vmatprep.subr.mxu0 0.0
    %1450 = vmatpush2.msra.mxu0 0.0
    %1451 = vmatprep.subr.mxu0 0.0
    %1452 = vmatpush2.msra.mxu0 0.0
    %1453 = vmatprep.subr.mxu0 0.0
    %1454 = vmatpush2.msra.mxu0 0.0
    %1455 = vmatprep.subr.mxu0 0.0
    %1456 = vmatpush2.msra.mxu0 0.0
    %1457 = vmatprep.subr.mxu0 0.0
    %1458 = vmatpush2.msra.mxu0 0.0
    %1459 = vmatprep.subr.mxu0 0.0
    %1460 = vmatpush2.msra.mxu0 0.0
    %1461 = vmatprep.subr.mxu0 0.0
    %1462 = vmatpush2.msra.mxu0 0.0
    %1463 = vmatprep.subr.mxu0 0.0
    %1464 = vmatpush2.msra.mxu0 0.0
    %1465 = vmatprep.subr.mxu0 0.0
    %1466 = vmatpush2.msra.mxu0 0.0
    %1467 = vmatprep.subr.mxu0 0.0
    %1468 = vmatpush2.msra.mxu0 0.0
    %1469 = vmatprep.subr.mxu0 0.0
    %1470 = vmatpush2.msra.mxu0 0.0
    %1471 = vmatprep.subr.mxu0 0.0
    %1472 = vmatpush2.msra.mxu0 0.0
    %1473 = vmatprep.subr.mxu0 0.0
    %1474 = vmatpush2.msra.mxu0 0.0
    %1475 = vmatprep.mubr.f32.mxu0 0.0
    %1476 = vmatmul.mubr.f32.gmra.mxu0 %v1409
    %v1477 = vpop.f32.mrf.mxu0
    %v1478 = vadd.f32 0.0, %v1477
    %v1479 = vpop.f32.mrf.mxu0
    %1480 = vdwg.mxu0
    %v1482 = vsel %vm46, %v1347, 0
    %1484 = vmatprep.subr.mxu0 0.0
    %1485 = vmatpush1.msra.mxu0 0.0
    %1486 = vmatprep.subr.mxu0 0.0
    %1487 = vmatpush1.msra.mxu0 0.0
    %1488 = vmatprep.subr.mxu0 0.0
    %1489 = vmatpush1.msra.mxu0 0.0
    %1490 = vmatprep.subr.mxu0 0.0
    %1491 = vmatpush1.msra.mxu0 0.0
    %1492 = vmatprep.subr.mxu0 0.0
    %1493 = vmatpush1.msra.mxu0 0.0
    %1494 = vmatprep.subr.mxu0 0.0
    %1495 = vmatpush1.msra.mxu0 0.0
    %1496 = vmatprep.subr.mxu0 0.0
    %1497 = vmatpush1.msra.mxu0 0.0
    %1498 = vmatprep.subr.mxu0 0.0
    %1499 = vmatpush1.msra.mxu0 0.0
    %1500 = vmatprep.subr.mxu0 0.0
    %1501 = vmatpush1.msra.mxu0 %v1371
    %1502 = vmatprep.subr.mxu0 0.0
    %1503 = vmatpush1.msra.mxu0 %v1370
    %1504 = vmatprep.subr.mxu0 0.0
    %1505 = vmatpush1.msra.mxu0 %v1369
    %1506 = vmatprep.subr.mxu0 0.0
    %1507 = vmatpush1.msra.mxu0 %v1368
    %1508 = vmatprep.subr.mxu0 0.0
    %1509 = vmatpush1.msra.mxu0 %v1367
    %1510 = vmatprep.subr.mxu0 0.0
    %1511 = vmatpush1.msra.mxu0 %v1366
    %1512 = vmatprep.subr.mxu0 0.0
    %1513 = vmatpush1.msra.mxu0 %v1365
    %1514 = vmatprep.subr.mxu0 0.0
    %1515 = vmatpush1.msra.mxu0 %v1364
    %1516 = vmatprep.subr.mxu0 0.0
    %1517 = vmatpush2.msra.mxu0 0.0
    %1518 = vmatprep.subr.mxu0 0.0
    %1519 = vmatpush2.msra.mxu0 0.0
    %1520 = vmatprep.subr.mxu0 0.0
    %1521 = vmatpush2.msra.mxu0 0.0
    %1522 = vmatprep.subr.mxu0 0.0
    %1523 = vmatpush2.msra.mxu0 0.0
    %1524 = vmatprep.subr.mxu0 0.0
    %1525 = vmatpush2.msra.mxu0 0.0
    %1526 = vmatprep.subr.mxu0 0.0
    %1527 = vmatpush2.msra.mxu0 0.0
    %1528 = vmatprep.subr.mxu0 0.0
    %1529 = vmatpush2.msra.mxu0 0.0
    %1530 = vmatprep.subr.mxu0 0.0
    %1531 = vmatpush2.msra.mxu0 0.0
    %1532 = vmatprep.subr.mxu0 0.0
    %1533 = vmatpush2.msra.mxu0 0.0
    %1534 = vmatprep.subr.mxu0 0.0
    %1535 = vmatpush2.msra.mxu0 0.0
    %1536 = vmatprep.subr.mxu0 0.0
    %1537 = vmatpush2.msra.mxu0 0.0
    %1538 = vmatprep.subr.mxu0 0.0
    %1539 = vmatpush2.msra.mxu0 0.0
    %1540 = vmatprep.subr.mxu0 0.0
    %1541 = vmatpush2.msra.mxu0 0.0
    %1542 = vmatprep.subr.mxu0 0.0
    %1543 = vmatpush2.msra.mxu0 0.0
    %1544 = vmatprep.subr.mxu0 0.0
    %1545 = vmatpush2.msra.mxu0 0.0
    %1546 = vmatprep.subr.mxu0 0.0
    %1547 = vmatpush2.msra.mxu0 0.0
    %1548 = vmatprep.mubr.f32.mxu0 0.0
    %1549 = vmatmul.mubr.f32.gmra.mxu0 %v1482
    %v1550 = vpop.f32.mrf.mxu0
    %v1551 = vadd.f32 %v1478, %v1550
    %v1552 = vpop.f32.mrf.mxu0
    %1553 = vdwg.mxu0
    %v1554 = vld [vmem:[%s5] sm:$0x1]
    %v1556 = vlaneseq
    %v1557 = vshrl.u32 %v1556, 7
    %v1558 = vsub.s32 0, %v1557
    %v1559 = vrot.slane %v1554, %v1558
    %v1561 = vadd.f32 %v1551, %v1559
    %v1562 = vmax.f32 %v1561, 0.0
    %v1563 = vld [vmem:[%s6] sm:$0xff]
    %v1564 = vld [vmem:[%s6 + $0x8] sm:$0xff]
    %v1565 = vld [vmem:[%s6 + $0x10] sm:$0xff]
    %v1566 = vld [vmem:[%s6 + $0x18] sm:$0xff]
    %v1567 = vld [vmem:[%s7] sm:$0x1]
    %v1569 = vlaneseq
    %v1570 = vshrl.u32 %v1569, 7
    %v1571 = vsub.s32 0, %v1570
    %v1572 = vrot.slane %v1567, %v1571
    %vm1574 = vcmask 261120
    %v1576 = vsel %vm1574, %v1562, 0
    %1578 = vmatprep.subr.mxu0 0.0
    %1579 = vmatpush1.msra.mxu0 0.0
    %1580 = vmatprep.subr.mxu0 0.0
    %1581 = vmatpush1.msra.mxu0 0.0
    %1582 = vmatprep.subr.mxu0 0.0
    %1583 = vmatpush1.msra.mxu0 0.0
    %1584 = vmatprep.subr.mxu0 0.0
    %1585 = vmatpush1.msra.mxu0 0.0
    %1586 = vmatprep.subr.mxu0 0.0
    %1587 = vmatpush1.msra.mxu0 0.0
    %1588 = vmatprep.subr.mxu0 0.0
    %1589 = vmatpush1.msra.mxu0 0.0
    %1590 = vmatprep.subr.mxu0 0.0
    %1591 = vmatpush1.msra.mxu0 0.0
    %1592 = vmatprep.subr.mxu0 0.0
    %1593 = vmatpush1.msra.mxu0 0.0
    %1594 = vmatprep.subr.mxu0 0.0
    %1595 = vmatpush1.msra.mxu0 0.0
    %1596 = vmatprep.subr.mxu0 0.0
    %1597 = vmatpush1.msra.mxu0 0.0
    %1598 = vmatprep.subr.mxu0 0.0
    %1599 = vmatpush1.msra.mxu0 0.0
    %1600 = vmatprep.subr.mxu0 0.0
    %1601 = vmatpush1.msra.mxu0 0.0
    %1602 = vmatprep.subr.mxu0 0.0
    %1603 = vmatpush1.msra.mxu0 %v1566
    %1604 = vmatprep.subr.mxu0 0.0
    %1605 = vmatpush1.msra.mxu0 %v1565
    %1606 = vmatprep.subr.mxu0 0.0
    %1607 = vmatpush1.msra.mxu0 %v1564
    %1608 = vmatprep.subr.mxu0 0.0
    %1609 = vmatpush1.msra.mxu0 %v1563
    %1610 = vmatprep.subr.mxu0 0.0
    %1611 = vmatpush2.msra.mxu0 0.0
    %1612 = vmatprep.subr.mxu0 0.0
    %1613 = vmatpush2.msra.mxu0 0.0
    %1614 = vmatprep.subr.mxu0 0.0
    %1615 = vmatpush2.msra.mxu0 0.0
    %1616 = vmatprep.subr.mxu0 0.0
    %1617 = vmatpush2.msra.mxu0 0.0
    %1618 = vmatprep.subr.mxu0 0.0
    %1619 = vmatpush2.msra.mxu0 0.0
    %1620 = vmatprep.subr.mxu0 0.0
    %1621 = vmatpush2.msra.mxu0 0.0
    %1622 = vmatprep.subr.mxu0 0.0
    %1623 = vmatpush2.msra.mxu0 0.0
    %1624 = vmatprep.subr.mxu0 0.0
    %1625 = vmatpush2.msra.mxu0 0.0
    %1626 = vmatprep.subr.mxu0 0.0
    %1627 = vmatpush2.msra.mxu0 0.0
    %1628 = vmatprep.subr.mxu0 0.0
    %1629 = vmatpush2.msra.mxu0 0.0
    %1630 = vmatprep.subr.mxu0 0.0
    %1631 = vmatpush2.msra.mxu0 0.0
    %1632 = vmatprep.subr.mxu0 0.0
    %1633 = vmatpush2.msra.mxu0 0.0
    %1634 = vmatprep.subr.mxu0 0.0
    %1635 = vmatpush2.msra.mxu0 0.0
    %1636 = vmatprep.subr.mxu0 0.0
    %1637 = vmatpush2.msra.mxu0 0.0
    %1638 = vmatprep.subr.mxu0 0.0
    %1639 = vmatpush2.msra.mxu0 0.0
    %1640 = vmatprep.subr.mxu0 0.0
    %1641 = vmatpush2.msra.mxu0 0.0
    %1642 = vmatprep.mubr.f32.mxu0 0.0
    %1643 = vmatmul.mubr.f32.gmra.mxu0 %v1576
    %v1644 = vpop.f32.mrf.mxu0
    %v1645 = vadd.f32 %v1572, %v1644
    %v1646 = vpop.f32.mrf.mxu0
    %1647 = vdwg.mxu0
    %1648 = vmax.xlane.f32.xlu0 %v1645
    %v1649 = vpop.xlane.xlu0 %1648
    %v1650 = vsub.f32 %v1645, %v1649
    %v1651 = vmul.f32 %v1650, 1.442695
    %v1652 = vpow.pop %v1651
    %1653 = vadd.xlane.f32.xlu0 %v1652
    %v1654 = vpop.xlane.xlu0 %1653
    %v1655 = vlog2.pop %v1654
    %v1656 = vmul.f32 %v1655, 0.6931472
    %v1657 = vsub.f32 %v1650, %v1656
    %1658 = vst [vmem:[#allocation2] sm:$0xff] %v1657
    // Predicated region
    $region34: #{tpu_custom_call.1} parent=1 // pred_check
      _
    $region35: #{tpu_custom_call.1} parent=1 // pred_check_branch
      %1660 = sbr.rel (0) target = $region37
    $region36: #{tpu_custom_call.1} parent=1 // pred_region
      %s1662 = ssub.s32 128, 128
      %1663 = vsyncadd [#allocation3], %s1662
      %s1665 = sshll.u32 [#allocation2], 4
      %s1666 = int_to_ptr.vmem [resolvable:$true] %s1665
      %1668 = dma.vmem_to_hbm [thread:$0]  %s1666, 128, %s8, [#allocation3]
    $region37: #{tpu_custom_call.1} parent=1 // pred_fallthru
      _
    // Predicated region
    $region38: #{tpu_custom_call.1} parent=1 // pred_check
      _
    $region39: #{tpu_custom_call.1} parent=1 // pred_check_branch
      %1670 = sbr.rel (0) target = $region41
    $region40: #{tpu_custom_call.1} parent=1 // pred_region
      %1671 = dma.done [#allocation3], 128
    $region41: #{tpu_custom_call.1} parent=1 // pred_fallthru
      _
    %1672 = vsyncpa [#allocation3], 1

</llo_original>
